<compile_context>
chip_gen: v7x
topology: tpu7x:2x2x1
jax: 0.10.0
libtpu: 0.0.40
codegen_flags: <defaults>
</compile_context>

<pallas_src>
import functools

import numpy as np
import jax
import jax.numpy as jnp
from jax import lax
from jax.experimental import pallas as pl
from jax.experimental.pallas import tpu as pltpu

ACT_DTYPE = jnp.bfloat16   # activation storage / MXU operand dtype


# ----------------------------------------------------------------------------
# Helpers
# ----------------------------------------------------------------------------

def _round_up(x, m):
    return ((x + m - 1) // m) * m


def _cp(c):
    """Channel count carried by activations (multiple of 128)."""
    return _round_up(c, 128)


def _pick_tile(size, max_tile=512):
    """Largest multiple of 128 <= max_tile that divides `size`; if `size` is not a
    multiple of 128, use the full axis (legal: block dim == full array dim)."""
    if size % 128 != 0:
        return size
    best = 128
    t = 256
    while t <= min(size, max_tile):
        if size % t == 0:
            best = t
        t += 128
    return best


# ----------------------------------------------------------------------------
# Pallas fused matmul kernel:  (A @ W) * scale + shift [+ residual] [ReLU]
# ----------------------------------------------------------------------------

@functools.partial(jax.jit, static_argnames=("relu", "out_dtype"))
def fused_matmul(A, prep, residual=None, *, relu, out_dtype=ACT_DTYPE):
    """A: (M, K).  prep['w']: (K, Np) pre-padded/bf16 weight; prep['scale'], prep['shift']:
    (1, Np) f32 (BN + bias folded).  residual: optional (M, Np).  Returns (M, Np)."""
    w, scale, shift = prep["w"], prep["scale"], prep["shift"]
    M, K = A.shape
    Kp, Np = w.shape
    assert Kp == K, (Kp, K)   # K is never padded per call; weights were prepped to match.

    if A.dtype != w.dtype:
        A = A.astype(w.dtype)

    tk = _pick_tile(K, 512)
    tn = _pick_tile(Np, 512)

    # M tile: large tm => the whole (K, Np) weight streams from HBM only ceil(M/tm)
    # times.  (Grid *order* does not change HBM traffic; only the tile sizes do.)
    w_bytes = K * Np * w.dtype.itemsize
    a_bytes = M * K * w.dtype.itemsize
    if max(tk, tn) <= 128:
        tm_cap = 4096          # tiny K/N (resize, pooled branch): take all of M at once
    elif w_bytes >= a_bytes:
        tm_cap = 1024          # weight-dominated layers: stream the weight once or twice
    else:
        tm_cap = 512
    tm = M if M <= tm_cap else tm_cap   # tm_cap is a multiple of 16 (bf16 sublane pack)

    grid_m = pl.cdiv(M, tm)    # ragged last block handled by masked writes
    grid_n = Np // tn
    grid_k = K // tk

    has_res = residual is not None
    args = [A, w, scale, shift] + ([residual] if has_res else [])

    def kernel(*refs):
        if has_res:
            a_ref, w_ref, s_ref, b_ref, r_ref, o_ref, acc_ref = refs
        else:
            a_ref, w_ref, s_ref, b_ref, o_ref, acc_ref = refs

        k = pl.program_id(2)
        prod = jnp.dot(a_ref[...], w_ref[...], preferred_element_type=jnp.float32)

        @pl.when(k == 0)
        def _():                      # direct write: no zero-init + read-modify-write
            acc_ref[...] = prod

        @pl.when(k != 0)
        def _():
            acc_ref[...] += prod

        @pl.when(k == pl.num_programs(2) - 1)
        def _():
            y = acc_ref[...] * s_ref[...] + b_ref[...]
            if has_res:
                y = y + r_ref[...].astype(jnp.float32)
            if relu:
                y = jnp.maximum(y, 0.0)
            o_ref[...] = y.astype(o_ref.dtype)

    in_specs = [
        pl.BlockSpec((tm, tk), lambda i, j, k: (i, k)),
        pl.BlockSpec((tk, tn), lambda i, j, k: (k, j)),
        pl.BlockSpec((1, tn), lambda i, j, k: (0, j)),
        pl.BlockSpec((1, tn), lambda i, j, k: (0, j)),
    ]
    if has_res:
        in_specs.append(pl.BlockSpec((tm, tn), lambda i, j, k: (i, j)))

    # TODO(synk): on v6e/v5e (128 MiB VMEM) pipeline_mode=pl.Buffered(3) on the weight
    # spec can hide long weight DMAs on the big-K layers; kept at depth 2 for v7x safety.
    return pl.pallas_call(
        kernel,
        out_shape=jax.ShapeDtypeStruct((M, Np), out_dtype),
        grid_spec=pltpu.PrefetchScalarGridSpec(
            num_scalar_prefetch=0,
            grid=(grid_m, grid_n, grid_k),
            in_specs=in_specs,
            out_specs=pl.BlockSpec((tm, tn), lambda i, j, k: (i, j)),
            scratch_shapes=[pltpu.VMEM((tm, tn), jnp.float32)],
        ),
        compiler_params=pltpu.CompilerParams(
            dimension_semantics=("parallel", "parallel", "arbitrary"),
            vmem_limit_bytes=48 * 1024 * 1024,   # < 64 MiB physical VMEM on v7x
        ),
    )(*args)


# ----------------------------------------------------------------------------
# Conv wrappers (NHWC, bf16 activations, channel dims padded to 128-multiples)
# ----------------------------------------------------------------------------

def conv1x1(x, prep, *, stride=1, relu=False, residual=None, out_dtype=ACT_DTYPE):
    """1x1 conv: pure matmul, no im2col, no per-call pads."""
    if stride > 1:
        x = x[:, ::stride, ::stride, :]
    N, H, W, C = x.shape
    A = x.reshape(N * H * W, C)
    r = None if residual is None else residual.reshape(N * H * W, -1)
    y = fused_matmul(A, prep, r, relu=relu, out_dtype=out_dtype)
    return y.reshape(N, H, W, -1)


def im2col_nhwc(x, kh, kw, stride, padding, dilation):
    N, H, W, C = x.shape
    Ho = (H + 2 * padding - dilation * (kh - 1) - 1) // stride + 1
    Wo = (W + 2 * padding - dilation * (kw - 1) - 1) // stride + 1
    xp = jnp.pad(x, ((0, 0), (padding, padding), (padding, padding), (0, 0)))
    cols = []
    for i in range(kh):
        for j in range(kw):
            h0 = i * dilation
            w0 = j * dilation
            cols.append(
                xp[:, h0:h0 + stride * (Ho - 1) + 1:stride,
                       w0:w0 + stride * (Wo - 1) + 1:stride, :]
                .reshape(N * Ho * Wo, C))
    # column ordering: (tap_i, tap_j, cin) -- matches the weight prep below.
    return jnp.concatenate(cols, axis=1), Ho, Wo


def conv_spatial(x, prep, kh, kw, *, stride=1, padding=0, dilation=1,
                 relu=False, residual=None, out_dtype=ACT_DTYPE):
    """kh x kw conv via bf16 NHWC im2col + fused Pallas matmul.
    TODO(synk): replace with a tap-split direct conv to avoid the kh*kw-expanded
    im2col matrix in HBM (biggest win for the dilated ASPP / layer3+4 convs)."""
    N = x.shape[0]
    A, Ho, Wo = im2col_nhwc(x, kh, kw, stride, padding, dilation)
    r = None if residual is None else residual.reshape(N * Ho * Wo, -1)
    y = fused_matmul(A, prep, r, relu=relu, out_dtype=out_dtype)
    return y.reshape(N, Ho, Wo, -1)


def maxpool_3x3_s2_p1(x):
    # Single fused window reduction: one HBM pass over the stem output.
    return lax.reduce_window(
        x, jnp.array(-jnp.inf, x.dtype), lax.max,
        window_dimensions=(1, 3, 3, 1), window_strides=(1, 2, 2, 1),
        padding=[(0, 0), (1, 1), (1, 1), (0, 0)])


# ----------------------------------------------------------------------------
# Bilinear resize (PyTorch align_corners=False) via Pallas matmuls (f32 logits)
# ----------------------------------------------------------------------------

def _interp_matrix(out_size, in_size):
    if in_size == 1:
        return np.ones((out_size, 1), np.float32)
    scale = in_size / out_size
    dst = np.arange(out_size)
    src = np.maximum((dst + 0.5) * scale - 0.5, 0.0)
    x0 = np.clip(np.floor(src).astype(np.int64), 0, in_size - 1)
    x1 = np.minimum(x0 + 1, in_size - 1)
    lam = (src - np.floor(src)).astype(np.float32)
    R = np.zeros((out_size, in_size), np.float32)
    R[np.arange(out_size), x0] += (1.0 - lam)
    R[np.arange(out_size), x1] += lam
    return R


def _plain_prep(Wm_np):
    """Identity-epilogue prep (no BN, no padding: exact K and N)."""
    K, Nn = Wm_np.shape
    return {"w": jnp.asarray(Wm_np, jnp.float32),
            "scale": jnp.ones((1, Nn), jnp.float32),
            "shift": jnp.zeros((1, Nn), jnp.float32)}


def bilinear_resize_nchw(x, out_h, out_w):
    """x: (N, C, H, W) f32.  Separable bilinear resize as two Pallas matmuls.
    TODO(synk): the intermediate transpose between the passes is a pure HBM shuffle."""
    N, C, H, W = x.shape
    x = x.astype(jnp.float32)
    pw = _plain_prep(_interp_matrix(out_w, W).T)   # (W, out_w)
    t = fused_matmul(x.reshape(N * C * H, W), pw, relu=False, out_dtype=jnp.float32)
    t = t.reshape(N, C, H, out_w).transpose(0, 1, 3, 2).reshape(N * C * out_w, H)
    ph = _plain_prep(_interp_matrix(out_h, H).T)   # (H, out_h)
    t = fused_matmul(t, ph, relu=False, out_dtype=jnp.float32)
    return t.reshape(N, C, out_w, out_h).transpose(0, 1, 3, 2)


# ----------------------------------------------------------------------------
# Architecture description + parameter init (weights prepared for matmul at init)
# ----------------------------------------------------------------------------

RESNET101_LAYERS = [(64, 3, 1, False), (128, 4, 2, False),
                    (256, 23, 2, True), (512, 3, 2, True)]


def resnet101_arch():
    """Static block config for ResNet-101 with replace_stride_with_dilation=[F,T,T]."""
    arch = []
    inplanes, dilation = 64, 1
    for planes, blocks, stride, dilate in RESNET101_LAYERS:
        prev_dil = dilation
        if dilate:
            dilation *= stride
            stride = 1
        blks = [dict(planes=planes, stride=stride, dilation=prev_dil,
                     downsample=(stride != 1 or inplanes != planes * 4))]
        inplanes = planes * 4
        for _ in range(1, blocks):
            blks.append(dict(planes=planes, stride=1, dilation=dilation, downsample=False))
        arch.append(blks)
    return arch


def _keygen(seed=0):
    base = jax.random.PRNGKey(seed)
    i = 0
    while True:
        yield jax.random.fold_in(base, i)
        i += 1


def _init_conv(key, cout, cin, kh, kw):
    fan_in = cin * kh * kw
    return jax.random.normal(key, (cout, cin, kh, kw), jnp.float32) * (2.0 / fan_in) ** 0.5


def _init_bn(c):
    return dict(gamma=jnp.ones((c,), jnp.float32), beta=jnp.zeros((c,), jnp.float32),
                mean=jnp.zeros((c,), jnp.float32), var=jnp.ones((c,), jnp.float32))


def _prep_conv(w, bn=None, bias=None, cin_pad=None):
    """Fold BN(+bias), zero-pad cin->cin_pad (to match the padded activation channels of
    the producer) and cout->multiple of 128, reshape to matmul layout, bf16.  One-time."""
    cout, cin, kh, kw = w.shape
    cin_p = cin if cin_pad is None else cin_pad
    cout_p = _cp(cout)
    if cin_p != cin:
        w = jnp.pad(w, ((0, 0), (0, cin_p - cin), (0, 0), (0, 0)))
    Wm = jnp.transpose(w, (2, 3, 1, 0)).reshape(kh * kw * cin_p, cout)  # rows: (i, j, cin)
    if bn is not None:
        eps = 1e-5
        scale = bn["gamma"] / jnp.sqrt(bn["var"] + eps)
        shift = bn["beta"] - bn["mean"] * scale
        if bias is not None:
            shift = shift + bias * scale
    else:
        scale = jnp.ones((cout,), jnp.float32)
        shift = bias if bias is not None else jnp.zeros((cout,), jnp.float32)
    return {
        "w": jnp.pad(Wm, ((0, 0), (0, cout_p - cout))).astype(jnp.bfloat16),
        "scale": jnp.pad(scale, (0, cout_p - cout)).reshape(1, cout_p).astype(jnp.float32),
        "shift": jnp.pad(shift, (0, cout_p - cout)).reshape(1, cout_p).astype(jnp.float32),
    }


def init_model(num_classes, seed=0):
    arch = resnet101_arch()
    kg = _keygen(seed)

    # Stem: cin=3 stays unpadded (im2col K = 147 handled as a full-K single block).
    backbone = {"stem": _prep_conv(_init_conv(next(kg), 64, 3, 7, 7), bn=_init_bn(64))}
    layers = []
    inplanes = 64
    for layer_a in arch:
        blks = []
        for blk_a in layer_a:
            planes = blk_a["planes"]
            blk = {
                "conv1": _prep_conv(_init_conv(next(kg), planes, inplanes, 1, 1),
                                    bn=_init_bn(planes), cin_pad=_cp(inplanes)),
                "conv2": _prep_conv(_init_conv(next(kg), planes, planes, 3, 3),
                                    bn=_init_bn(planes), cin_pad=_cp(planes)),
                "conv3": _prep_conv(_init_conv(next(kg), planes * 4, planes, 1, 1),
                                    bn=_init_bn(planes * 4), cin_pad=_cp(planes)),
            }
            if blk_a["downsample"]:
                blk["down"] = _prep_conv(_init_conv(next(kg), planes * 4, inplanes, 1, 1),
                                         bn=_init_bn(planes * 4), cin_pad=_cp(inplanes))
            inplanes = planes * 4
            blks.append(blk)
        layers.append(blks)
    backbone["layers"] = layers

    aspp = {"c0": _prep_conv(_init_conv(next(kg), 256, 2048, 1, 1), bn=_init_bn(256))}
    for i in range(3):
        aspp[f"c{i + 1}"] = _prep_conv(_init_conv(next(kg), 256, 2048, 3, 3), bn=_init_bn(256))
    aspp["pool"] = _prep_conv(_init_conv(next(kg), 256, 2048, 1, 1), bn=_init_bn(256))
    # Projection conv (1280 -> 256) split: 1024-ch main part (4 computed branches) fed to
    # the Pallas kernel, 256-ch pool-branch slice folded into the epilogue residual.
    w_proj = _init_conv(next(kg), 256, 1280, 1, 1)
    bn_proj = _init_bn(256)
    proj_scale = bn_proj["gamma"] / jnp.sqrt(bn_proj["var"] + 1e-5)
    aspp["proj"] = _prep_conv(w_proj[:, :1024], bn=bn_proj)
    aspp["proj_pool_w"] = jnp.transpose(w_proj[:, 1024:1280, 0, 0], (1, 0)) * proj_scale[None, :]

    head = {
        "w1": _prep_conv(_init_conv(next(kg), 256, 256, 3, 3), bn=_init_bn(256)),
        # custom classifier[4]: Conv3x3(256,256,bias)+BN+ReLU+Dropout+Conv1x1(256,num_classes,bias)
        "c4_1": _prep_conv(_init_conv(next(kg), 256, 256, 3, 3), bn=_init_bn(256),
                           bias=jax.random.normal(next(kg), (256,), jnp.float32) * 0.01),
        "c4_2": _prep_conv(_init_conv(next(kg), num_classes, 256, 1, 1),
                           bias=jax.random.normal(next(kg), (num_classes,), jnp.float32) * 0.01),
    }
    aux = {
        "w1": _prep_conv(_init_conv(next(kg), 256, 1024, 3, 3), bn=_init_bn(256)),
        "w2": _prep_conv(_init_conv(next(kg), 21, 256, 1, 1),
                         bias=jax.random.normal(next(kg), (21,), jnp.float32) * 0.01),
    }
    return {"backbone": backbone, "aspp": aspp, "head": head, "aux": aux}, arch


# ----------------------------------------------------------------------------
# Forward pass (DeepLabV3 + ResNet-101, custom classifier[4]) -- eval semantics
# ----------------------------------------------------------------------------

def bottleneck_forward(x, p, a):
    stride, dil = a["stride"], a["dilation"]
    if a["downsample"]:
        identity = conv1x1(x, p["down"], stride=stride, relu=False)
    else:
        identity = x
    out = conv1x1(x, p["conv1"], relu=True)
    out = conv_spatial(out, p["conv2"], 3, 3, stride=stride,
                       padding=dil, dilation=dil, relu=True)
    # residual add + ReLU fused into the epilogue of conv3
    out = conv1x1(out, p["conv3"], relu=True, residual=identity)
    return out


def backbone_forward(x, p, arch):
    x = conv_spatial(x, p["stem"], 7, 7, stride=2, padding=3, relu=True)
    x = maxpool_3x3_s2_p1(x)
    feats = {}
    for li, (layer_p, layer_a) in enumerate(zip(p["layers"], arch)):
        for blk_p, blk_a in zip(layer_p, layer_a):
            x = bottleneck_forward(x, blk_p, blk_a)
        if li == 2:
            feats["aux"] = x    # layer3 output (1024 ch)
        if li == 3:
            feats["out"] = x    # layer4 output (2048 ch)
    return feats


def aspp_forward(x, p):
    N, H, W, _ = x.shape
    branches = [conv1x1(x, p["c0"], relu=True)]
    for i, rate in enumerate((12, 24, 36)):
        branches.append(conv_spatial(x, p[f"c{i + 1}"], 3, 3,
                                     padding=rate, dilation=rate, relu=True))
    # ASPPPooling: global avg pool -> 1x1 conv/BN/ReLU.  Its bilinear upsample (1x1
    # source) is an exact broadcast, so its (spatially constant) contribution to the
    # projection conv is folded into the epilogue as a per-image residual; the concat
    # therefore only carries the 4 computed branches (1024 ch instead of 1280).
    gp = jnp.mean(x.astype(jnp.float32), axis=(1, 2), keepdims=True).astype(ACT_DTYPE)
    gp = conv1x1(gp, p["pool"], relu=True, out_dtype=jnp.float32)        # (N,1,1,256)
    contrib = jnp.dot(gp.reshape(N, -1), p["proj_pool_w"])               # (N,256) f32
    res = jnp.broadcast_to(contrib[:, None, None, :], (N, H, W, contrib.shape[-1]))
    cat = jnp.concatenate(branches, axis=-1)                             # (N,H,W,1024)
    out = conv1x1(cat, p["proj"], relu=True, residual=res)
    # Dropout(0.5): identity (eval mode)
    return out


def classifier_forward(x, p_aspp, p_head):
    x = aspp_forward(x, p_aspp)
    x = conv_spatial(x, p_head["w1"], 3, 3, padding=1, relu=True)
    # --- custom classifier[4] ---
    x = conv_spatial(x, p_head["c4_1"], 3, 3, padding=1, relu=True)
    # Dropout(0.5): identity (eval mode)
    x = conv1x1(x, p_head["c4_2"], relu=False, out_dtype=jnp.float32)
    return x   # channel dim padded to 128; sliced by the caller


def aux_forward(x, p):
    x = conv_spatial(x, p["w1"], 3, 3, padding=1, relu=True)
    # Dropout(0.1): identity (eval mode)
    x = conv1x1(x, p["w2"], relu=False, out_dtype=jnp.float32)
    return x


def custom_deeplabv3_forward(x, params, arch, num_classes):
    N, _, H, W = x.shape
    xh = jnp.transpose(x, (0, 2, 3, 1)).astype(ACT_DTYPE)     # NCHW -> NHWC bf16 (once)
    feats = backbone_forward(xh, params["backbone"], arch)

    out = classifier_forward(feats["out"], params["aspp"], params["head"])[..., :num_classes]
    out = jnp.transpose(out, (0, 3, 1, 2))                    # NHWC -> NCHW f32 (once)
    out = bilinear_resize_nchw(out, H, W)

    aux = aux_forward(feats["aux"], params["aux"])[..., :21]
    aux = jnp.transpose(aux, (0, 3, 1, 2))
    aux = bilinear_resize_nchw(aux, H, W)
    return {"out": out, "aux": aux}


# ----------------------------------------------------------------------------

if __name__ == "__main__":
    num_classes = 5
    x = jax.random.normal(jax.random.PRNGKey(0), (2, 3, 32, 32), jnp.float32)
    params, arch = init_model(num_classes, seed=0)

    result = custom_deeplabv3_forward(x, params, arch, num_classes)
    jax.block_until_ready(result["out"])
    jax.block_until_ready(result["aux"])

    assert result["out"].shape == (2, num_classes, 32, 32), result["out"].shape
    assert result["aux"].shape == (2, 21, 32, 32), result["aux"].shape
    assert bool(jnp.isfinite(result["out"]).all())
    assert bool(jnp.isfinite(result["aux"]).all())
    print("KERNEL_OK")
</pallas_src>

<mosaic_0001>
module attributes {stable_mosaic.version = 11 : i64} {
  func.func @kernel(%arg0: i32, %arg1: i32, %arg2: i32, %arg3: memref<512x147xbf16, #tpu.memory_space<vmem>>, %arg4: memref<147x128xbf16, #tpu.memory_space<vmem>>, %arg5: memref<1x128xf32, #tpu.memory_space<vmem>>, %arg6: memref<1x128xf32, #tpu.memory_space<vmem>>, %arg7: memref<512x128xbf16, #tpu.memory_space<vmem>>, %arg8: memref<512x128xf32, #tpu.memory_space<vmem>>) attributes {dimension_semantics = [#tpu.dimension_semantics<parallel>, #tpu.dimension_semantics<parallel>, #tpu.dimension_semantics<arbitrary>], iteration_bounds = array<i64: 1, 1, 1>, scalar_prefetch = 0 : i64, scratch_operands = 1 : i64, tpu.core_type = #tpu.core_type<tc>, window_params = [{transform_indices = @transform_0, window_bounds = array<i64: 512, 147>}, {transform_indices = @transform_1, window_bounds = array<i64: 147, 128>}, {transform_indices = @transform_2, window_bounds = array<i64: 1, 128>}, {transform_indices = @transform_3, window_bounds = array<i64: 1, 128>}, {transform_indices = @transform_4, window_bounds = array<i64: 512, 128>}]} {
    %c0 = arith.constant 0 : index
    %c0_0 = arith.constant 0 : index
    %0 = vector.load %arg3[%c0, %c0_0] : memref<512x147xbf16, #tpu.memory_space<vmem>>, vector<512x147xbf16>
    %c0_1 = arith.constant 0 : index
    %c0_2 = arith.constant 0 : index
    %1 = vector.load %arg4[%c0_1, %c0_2] : memref<147x128xbf16, #tpu.memory_space<vmem>>, vector<147x128xbf16>
    %cst = arith.constant dense<0.000000e+00> : vector<512x128xf32>
    %2 = tpu.matmul %0, %1, %cst {dimension_numbers = #tpu.dot_dimension_numbers<[1], [0], [0], [1], [0, 0, 1, 1], [], []>} : vector<512x147xbf16>, vector<147x128xbf16>, vector<512x128xf32> -> vector<512x128xf32>
    %c0_i32 = arith.constant 0 : i32
    %3 = arith.cmpi eq, %arg2, %c0_i32 : i32
    %4 = arith.extui %3 : i1 to i32
    %c0_i32_3 = arith.constant 0 : i32
    %5 = arith.cmpi ne, %4, %c0_i32_3 : i32
    scf.if %5 {
      %c0_8 = arith.constant 0 : index
      %c0_9 = arith.constant 0 : index
      %12 = vector.load %arg8[%c0_8, %c0_9] : memref<512x128xf32, #tpu.memory_space<vmem>>, vector<512x128xf32>
      tpu.vector_store %arg8[%c0_8, %c0_9], %2 {strides = array<i32>} : memref<512x128xf32, #tpu.memory_space<vmem>>, vector<512x128xf32>,
    } else {
    }
    %c0_i32_4 = arith.constant 0 : i32
    %6 = arith.cmpi ne, %arg2, %c0_i32_4 : i32
    %7 = arith.extui %6 : i1 to i32
    %c0_i32_5 = arith.constant 0 : i32
    %8 = arith.cmpi ne, %7, %c0_i32_5 : i32
    scf.if %8 {
      %c0_8 = arith.constant 0 : index
      %c0_9 = arith.constant 0 : index
      %12 = vector.load %arg8[%c0_8, %c0_9] : memref<512x128xf32, #tpu.memory_space<vmem>>, vector<512x128xf32>
      %13 = arith.addf %12, %2 : vector<512x128xf32>
      %c0_10 = arith.constant 0 : index
      %c0_11 = arith.constant 0 : index
      %14 = vector.load %arg8[%c0_10, %c0_11] : memref<512x128xf32, #tpu.memory_space<vmem>>, vector<512x128xf32>
      tpu.vector_store %arg8[%c0_10, %c0_11], %13 {strides = array<i32>} : memref<512x128xf32, #tpu.memory_space<vmem>>, vector<512x128xf32>,
    } else {
    }
    %c0_i32_6 = arith.constant 0 : i32
    %9 = arith.cmpi eq, %arg2, %c0_i32_6 : i32
    %10 = arith.extui %9 : i1 to i32
    %c0_i32_7 = arith.constant 0 : i32
    %11 = arith.cmpi ne, %10, %c0_i32_7 : i32
    scf.if %11 {
      %c0_8 = arith.constant 0 : index
      %c0_9 = arith.constant 0 : index
      %12 = vector.load %arg8[%c0_8, %c0_9] : memref<512x128xf32, #tpu.memory_space<vmem>>, vector<512x128xf32>
      %c0_10 = arith.constant 0 : index
      %c0_11 = arith.constant 0 : index
      %13 = vector.load %arg5[%c0_10, %c0_11] : memref<1x128xf32, #tpu.memory_space<vmem>>, vector<1x128xf32>
      %14 = vector.broadcast %13 : vector<1x128xf32> to vector<512x128xf32>
      %15 = arith.mulf %12, %14 : vector<512x128xf32>
      %c0_12 = arith.constant 0 : index
      %c0_13 = arith.constant 0 : index
      %16 = vector.load %arg6[%c0_12, %c0_13] : memref<1x128xf32, #tpu.memory_space<vmem>>, vector<1x128xf32>
      %17 = vector.broadcast %16 : vector<1x128xf32> to vector<512x128xf32>
      %18 = arith.addf %15, %17 : vector<512x128xf32>
      %cst_14 = arith.constant 0.000000e+00 : f32
      %19 = vector.broadcast %cst_14 : f32 to vector<512x128xf32>
      %20 = arith.maximumf %18, %19 : vector<512x128xf32>
      %21 = arith.truncf %20 : vector<512x128xf32> to vector<512x128xbf16>
      %c0_15 = arith.constant 0 : index
      %c0_16 = arith.constant 0 : index
      %22 = vector.load %arg7[%c0_15, %c0_16] : memref<512x128xbf16, #tpu.memory_space<vmem>>, vector<512x128xbf16>
      tpu.vector_store %arg7[%c0_15, %c0_16], %21 {strides = array<i32>} : memref<512x128xbf16, #tpu.memory_space<vmem>>, vector<512x128xbf16>,
    } else {
    }
    return
  }
  func.func @transform_0(%arg0: i32, %arg1: i32, %arg2: i32) -> (i32, i32) {
    %c0_i32 = arith.constant 0 : i32
    return %arg0, %arg2 : i32, i32
  }
  func.func @transform_1(%arg0: i32, %arg1: i32, %arg2: i32) -> (i32, i32) {
    %c0_i32 = arith.constant 0 : i32
    return %arg2, %arg1 : i32, i32
  }
  func.func @transform_2(%arg0: i32, %arg1: i32, %arg2: i32) -> (i32, i32) {
    %c0_i32 = arith.constant 0 : i32
    %c0_i32_0 = arith.constant 0 : i32
    return %c0_i32, %arg1 : i32, i32
  }
  func.func @transform_3(%arg0: i32, %arg1: i32, %arg2: i32) -> (i32, i32) {
    %c0_i32 = arith.constant 0 : i32
    %c0_i32_0 = arith.constant 0 : i32
    return %c0_i32, %arg1 : i32, i32
  }
  func.func @transform_4(%arg0: i32, %arg1: i32, %arg2: i32) -> (i32, i32) {
    %c0_i32 = arith.constant 0 : i32
    return %arg0, %arg1 : i32, i32
  }
}

</mosaic_0001>

<llo_original>
// kernel: fused_matmul.1
$region0: #{fused_matmul.1}
  #allocation0 [shape = 'u32[]', space=smem, size = 0x4, offset = 0x4, fixed_abs, tag = 'smem constant byte address 0x4 - core index']
  #allocation1 [shape = 'u32[144,128]{1,0:T(1,128)}', space=vmem, size = 0x12000, scoped, tag = 'internal scratch']
  #allocation2 [shape = 'f32[512,128]{1,0:T(8,128)}', space=vmem, size = 0x40000, scoped, tag = 'scratch operand']
  %s0 = inlined_call_operand.vmem [shape: bf16[512,147], index: 0, kind: input, shape index: {}]
  %s1 = inlined_call_operand.vmem [shape: bf16[147,128], index: 1, kind: input, shape index: {}]
  %s2 = inlined_call_operand.vmem [shape: f32[1,128], index: 2, kind: input, shape index: {}]
  %s3 = inlined_call_operand.vmem [shape: f32[1,128], index: 3, kind: input, shape index: {}]
  %s4 = inlined_call_operand.hbm [shape: bf16[512,128], index: 4, kind: output, shape index: {}]
  %s5 = sld [smem:[#allocation0]]
  $region38: #{fused_matmul.1} parent=0
    _
  %s7 = ssub.s32 1, %s5
  %s8 = scalar_select 0, %s7, %s5
  $region1: #{fused_matmul.1} parent=0
    #allocation3 [shape = 'u8[131072]{0}', space=vmem, size = 0x20000, scoped, tag = 'output window, operand 0, single buffered']
    #allocation4 [shape = 's32[1]{0}', space=sflag, size = 0x4, scoped, tag = 'scoped memory for fused_matmul.1']
    %9 = vsyncpa [#allocation4], 0
    // Predicated region
    $region2: #{fused_matmul.1} parent=1 // pred_check
      _
    $region3: #{fused_matmul.1} parent=1 // pred_check_branch
      %11 = sbr.rel (0) target = $region5
    $region4: #{fused_matmul.1} parent=1 // pred_region
      _
    $region5: #{fused_matmul.1} parent=1 // pred_fallthru
      _
    // Predicated region
    $region6: #{fused_matmul.1} parent=1 // pred_check
      _
    $region7: #{fused_matmul.1} parent=1 // pred_check_branch
      %13 = sbr.rel (0) target = $region9
    $region8: #{fused_matmul.1} parent=1 // pred_region
      _
    $region9: #{fused_matmul.1} parent=1 // pred_fallthru
      _
    // Predicated region
    $region10: #{fused_matmul.1} parent=1 // pred_check
      _
    $region11: #{fused_matmul.1} parent=1 // pred_check_branch
      %15 = sbr.rel (0) target = $region13
    $region12: #{fused_matmul.1} parent=1 // pred_region
      _
    $region13: #{fused_matmul.1} parent=1 // pred_fallthru
      _
    // Predicated region
    $region14: #{fused_matmul.1} parent=1 // pred_check
      _
    $region15: #{fused_matmul.1} parent=1 // pred_check_branch
      %17 = sbr.rel (0) target = $region17
    $region16: #{fused_matmul.1} parent=1 // pred_region
      _
    $region17: #{fused_matmul.1} parent=1 // pred_fallthru
      _
    %v19 = vld [vmem:[%s0] sm:$0xff]
    %v20 = vld [vmem:[%s0 + $0x8] sm:$0xff]
    %v21 = vld [vmem:[%s0 + $0x10] sm:$0xff]
    %v22 = vld [vmem:[%s0 + $0x18] sm:$0xff]
    %v23 = vld [vmem:[%s0 + $0x20] sm:$0xff]
    %v24 = vld [vmem:[%s0 + $0x28] sm:$0xff]
    %v25 = vld [vmem:[%s0 + $0x30] sm:$0xff]
    %v26 = vld [vmem:[%s0 + $0x38] sm:$0xff]
    %v27 = vld [vmem:[%s0 + $0x40] sm:$0xff]
    %v28 = vld [vmem:[%s0 + $0x48] sm:$0xff]
    %v29 = vld [vmem:[%s0 + $0x50] sm:$0xff]
    %v30 = vld [vmem:[%s0 + $0x58] sm:$0xff]
    %v31 = vld [vmem:[%s0 + $0x60] sm:$0xff]
    %v32 = vld [vmem:[%s0 + $0x68] sm:$0xff]
    %v33 = vld [vmem:[%s0 + $0x70] sm:$0xff]
    %v34 = vld [vmem:[%s0 + $0x78] sm:$0xff]
    %v35 = vld [vmem:[%s0 + $0x80] sm:$0xff]
    %v36 = vld [vmem:[%s0 + $0x88] sm:$0xff]
    %v37 = vld [vmem:[%s0 + $0x90] sm:$0xff]
    %v38 = vld [vmem:[%s0 + $0x98] sm:$0xff]
    %v39 = vld [vmem:[%s0 + $0xa0] sm:$0xff]
    %v40 = vld [vmem:[%s0 + $0xa8] sm:$0xff]
    %v41 = vld [vmem:[%s0 + $0xb0] sm:$0xff]
    %v42 = vld [vmem:[%s0 + $0xb8] sm:$0xff]
    %v43 = vld [vmem:[%s0 + $0xc0] sm:$0xff]
    %v44 = vld [vmem:[%s0 + $0xc8] sm:$0xff]
    %v45 = vld [vmem:[%s0 + $0xd0] sm:$0xff]
    %v46 = vld [vmem:[%s0 + $0xd8] sm:$0xff]
    %v47 = vld [vmem:[%s0 + $0xe0] sm:$0xff]
    %v48 = vld [vmem:[%s0 + $0xe8] sm:$0xff]
    %v49 = vld [vmem:[%s0 + $0xf0] sm:$0xff]
    %v50 = vld [vmem:[%s0 + $0xf8] sm:$0xff]
    %v51 = vld [vmem:[%s0 + $0x100] sm:$0xff]
    %v52 = vld [vmem:[%s0 + $0x108] sm:$0xff]
    %v53 = vld [vmem:[%s0 + $0x110] sm:$0xff]
    %v54 = vld [vmem:[%s0 + $0x118] sm:$0xff]
    %v55 = vld [vmem:[%s0 + $0x120] sm:$0xff]
    %v56 = vld [vmem:[%s0 + $0x128] sm:$0xff]
    %v57 = vld [vmem:[%s0 + $0x130] sm:$0xff]
    %v58 = vld [vmem:[%s0 + $0x138] sm:$0xff]
    %v59 = vld [vmem:[%s0 + $0x140] sm:$0xff]
    %v60 = vld [vmem:[%s0 + $0x148] sm:$0xff]
    %v61 = vld [vmem:[%s0 + $0x150] sm:$0xff]
    %v62 = vld [vmem:[%s0 + $0x158] sm:$0xff]
    %v63 = vld [vmem:[%s0 + $0x160] sm:$0xff]
    %v64 = vld [vmem:[%s0 + $0x168] sm:$0xff]
    %v65 = vld [vmem:[%s0 + $0x170] sm:$0xff]
    %v66 = vld [vmem:[%s0 + $0x178] sm:$0xff]
    %v67 = vld [vmem:[%s0 + $0x180] sm:$0xff]
    %v68 = vld [vmem:[%s0 + $0x188] sm:$0xff]
    %v69 = vld [vmem:[%s0 + $0x190] sm:$0xff]
    %v70 = vld [vmem:[%s0 + $0x198] sm:$0xff]
    %v71 = vld [vmem:[%s0 + $0x1a0] sm:$0xff]
    %v72 = vld [vmem:[%s0 + $0x1a8] sm:$0xff]
    %v73 = vld [vmem:[%s0 + $0x1b0] sm:$0xff]
    %v74 = vld [vmem:[%s0 + $0x1b8] sm:$0xff]
    %v75 = vld [vmem:[%s0 + $0x1c0] sm:$0xff]
    %v76 = vld [vmem:[%s0 + $0x1c8] sm:$0xff]
    %v77 = vld [vmem:[%s0 + $0x1d0] sm:$0xff]
    %v78 = vld [vmem:[%s0 + $0x1d8] sm:$0xff]
    %v79 = vld [vmem:[%s0 + $0x1e0] sm:$0xff]
    %v80 = vld [vmem:[%s0 + $0x1e8] sm:$0xff]
    %v81 = vld [vmem:[%s0 + $0x1f0] sm:$0xff]
    %v82 = vld [vmem:[%s0 + $0x1f8] sm:$0xff]
    %v83 = vld [vmem:[%s1] sm:$0xf]
    %v84 = vld [vmem:[%s1 + $0x4] sm:$0xf]
    %v85 = vld [vmem:[%s1 + $0x8] sm:$0xf]
    %v86 = vld [vmem:[%s1 + $0xc] sm:$0xf]
    %v87 = vld [vmem:[%s1 + $0x10] sm:$0xf]
    %v88 = vld [vmem:[%s1 + $0x14] sm:$0xf]
    %v89 = vld [vmem:[%s1 + $0x18] sm:$0xf]
    %v90 = vld [vmem:[%s1 + $0x1c] sm:$0xf]
    %v91 = vld [vmem:[%s1 + $0x20] sm:$0xf]
    %v92 = vld [vmem:[%s1 + $0x24] sm:$0xf]
    %v93 = vld [vmem:[%s1 + $0x28] sm:$0xf]
    %v94 = vld [vmem:[%s1 + $0x2c] sm:$0xf]
    %v95 = vld [vmem:[%s1 + $0x30] sm:$0xf]
    %v96 = vld [vmem:[%s1 + $0x34] sm:$0xf]
    %v97 = vld [vmem:[%s1 + $0x38] sm:$0xf]
    %v98 = vld [vmem:[%s1 + $0x3c] sm:$0xf]
    %v99 = vld [vmem:[%s1 + $0x40] sm:$0xf]
    %v100 = vld [vmem:[%s1 + $0x44] sm:$0xf]
    %v101 = vld [vmem:[%s1 + $0x48] sm:$0x3]
    %v166 = vunpack.c.l.b16 %v19
    %v167 = vunpack.c.h.b16 %v19
    %v168 = vunpack.c.l.b16 %v20
    %v169 = vunpack.c.h.b16 %v20
    %v170 = vunpack.c.l.b16 %v21
    %v171 = vunpack.c.h.b16 %v21
    %v172 = vunpack.c.l.b16 %v22
    %v173 = vunpack.c.h.b16 %v22
    %v174 = vunpack.c.l.b16 %v23
    %v175 = vunpack.c.h.b16 %v23
    %v176 = vunpack.c.l.b16 %v24
    %v177 = vunpack.c.h.b16 %v24
    %v178 = vunpack.c.l.b16 %v25
    %v179 = vunpack.c.h.b16 %v25
    %v180 = vunpack.c.l.b16 %v26
    %v181 = vunpack.c.h.b16 %v26
    %v182 = vunpack.c.l.b16 %v27
    %v183 = vunpack.c.h.b16 %v27
    %v184 = vunpack.c.l.b16 %v28
    %v185 = vunpack.c.h.b16 %v28
    %v186 = vunpack.c.l.b16 %v29
    %v187 = vunpack.c.h.b16 %v29
    %v188 = vunpack.c.l.b16 %v30
    %v189 = vunpack.c.h.b16 %v30
    %v190 = vunpack.c.l.b16 %v31
    %v191 = vunpack.c.h.b16 %v31
    %v192 = vunpack.c.l.b16 %v32
    %v193 = vunpack.c.h.b16 %v32
    %v194 = vunpack.c.l.b16 %v33
    %v195 = vunpack.c.h.b16 %v33
    %v196 = vunpack.c.l.b16 %v34
    %v197 = vunpack.c.h.b16 %v34
    %v198 = vunpack.c.l.b16 %v35
    %v199 = vunpack.c.h.b16 %v35
    %v200 = vunpack.c.l.b16 %v36
    %v201 = vunpack.c.h.b16 %v36
    %v202 = vunpack.c.l.b16 %v37
    %v203 = vunpack.c.h.b16 %v37
    %v204 = vunpack.c.l.b16 %v38
    %v205 = vunpack.c.h.b16 %v38
    %v206 = vunpack.c.l.b16 %v39
    %v207 = vunpack.c.h.b16 %v39
    %v208 = vunpack.c.l.b16 %v40
    %v209 = vunpack.c.h.b16 %v40
    %v210 = vunpack.c.l.b16 %v41
    %v211 = vunpack.c.h.b16 %v41
    %v212 = vunpack.c.l.b16 %v42
    %v213 = vunpack.c.h.b16 %v42
    %v214 = vunpack.c.l.b16 %v43
    %v215 = vunpack.c.h.b16 %v43
    %v216 = vunpack.c.l.b16 %v44
    %v217 = vunpack.c.h.b16 %v44
    %v218 = vunpack.c.l.b16 %v45
    %v219 = vunpack.c.h.b16 %v45
    %v220 = vunpack.c.l.b16 %v46
    %v221 = vunpack.c.h.b16 %v46
    %v222 = vunpack.c.l.b16 %v47
    %v223 = vunpack.c.h.b16 %v47
    %v224 = vunpack.c.l.b16 %v48
    %v225 = vunpack.c.h.b16 %v48
    %v226 = vunpack.c.l.b16 %v49
    %v227 = vunpack.c.h.b16 %v49
    %v228 = vunpack.c.l.b16 %v50
    %v229 = vunpack.c.h.b16 %v50
    %v230 = vunpack.c.l.b16 %v51
    %v231 = vunpack.c.h.b16 %v51
    %v232 = vunpack.c.l.b16 %v52
    %v233 = vunpack.c.h.b16 %v52
    %v234 = vunpack.c.l.b16 %v53
    %v235 = vunpack.c.h.b16 %v53
    %v236 = vunpack.c.l.b16 %v54
    %v237 = vunpack.c.h.b16 %v54
    %v238 = vunpack.c.l.b16 %v55
    %v239 = vunpack.c.h.b16 %v55
    %v240 = vunpack.c.l.b16 %v56
    %v241 = vunpack.c.h.b16 %v56
    %v242 = vunpack.c.l.b16 %v57
    %v243 = vunpack.c.h.b16 %v57
    %v244 = vunpack.c.l.b16 %v58
    %v245 = vunpack.c.h.b16 %v58
    %v246 = vunpack.c.l.b16 %v59
    %v247 = vunpack.c.h.b16 %v59
    %v248 = vunpack.c.l.b16 %v60
    %v249 = vunpack.c.h.b16 %v60
    %v250 = vunpack.c.l.b16 %v61
    %v251 = vunpack.c.h.b16 %v61
    %v252 = vunpack.c.l.b16 %v62
    %v253 = vunpack.c.h.b16 %v62
    %v254 = vunpack.c.l.b16 %v63
    %v255 = vunpack.c.h.b16 %v63
    %v256 = vunpack.c.l.b16 %v64
    %v257 = vunpack.c.h.b16 %v64
    %v258 = vunpack.c.l.b16 %v65
    %v259 = vunpack.c.h.b16 %v65
    %v260 = vunpack.c.l.b16 %v66
    %v261 = vunpack.c.h.b16 %v66
    %v262 = vunpack.c.l.b16 %v67
    %v263 = vunpack.c.h.b16 %v67
    %v264 = vunpack.c.l.b16 %v68
    %v265 = vunpack.c.h.b16 %v68
    %v266 = vunpack.c.l.b16 %v69
    %v267 = vunpack.c.h.b16 %v69
    %v268 = vunpack.c.l.b16 %v70
    %v269 = vunpack.c.h.b16 %v70
    %v270 = vunpack.c.l.b16 %v71
    %v271 = vunpack.c.h.b16 %v71
    %v272 = vunpack.c.l.b16 %v72
    %v273 = vunpack.c.h.b16 %v72
    %v274 = vunpack.c.l.b16 %v73
    %v275 = vunpack.c.h.b16 %v73
    %v276 = vunpack.c.l.b16 %v74
    %v277 = vunpack.c.h.b16 %v74
    %v278 = vunpack.c.l.b16 %v75
    %v279 = vunpack.c.h.b16 %v75
    %v280 = vunpack.c.l.b16 %v76
    %v281 = vunpack.c.h.b16 %v76
    %v282 = vunpack.c.l.b16 %v77
    %v283 = vunpack.c.h.b16 %v77
    %v284 = vunpack.c.l.b16 %v78
    %v285 = vunpack.c.h.b16 %v78
    %v286 = vunpack.c.l.b16 %v79
    %v287 = vunpack.c.h.b16 %v79
    %v288 = vunpack.c.l.b16 %v80
    %v289 = vunpack.c.h.b16 %v80
    %v290 = vunpack.c.l.b16 %v81
    %v291 = vunpack.c.h.b16 %v81
    %v292 = vunpack.c.l.b16 %v82
    %v293 = vunpack.c.h.b16 %v82
    %v294 = vpack.c.b16 %v168, %v166
    %v295 = vpack.c.b16 %v169, %v167
    %v296 = vpack.c.b16 %v172, %v170
    %v297 = vpack.c.b16 %v173, %v171
    %v298 = vpack.c.b16 %v176, %v174
    %v299 = vpack.c.b16 %v177, %v175
    %v300 = vpack.c.b16 %v180, %v178
    %v301 = vpack.c.b16 %v181, %v179
    %v302 = vpack.c.b16 %v184, %v182
    %v303 = vpack.c.b16 %v185, %v183
    %v304 = vpack.c.b16 %v188, %v186
    %v305 = vpack.c.b16 %v189, %v187
    %v306 = vpack.c.b16 %v192, %v190
    %v307 = vpack.c.b16 %v193, %v191
    %v308 = vpack.c.b16 %v196, %v194
    %v309 = vpack.c.b16 %v197, %v195
    %v310 = vpack.c.b16 %v200, %v198
    %v311 = vpack.c.b16 %v201, %v199
    %v312 = vpack.c.b16 %v204, %v202
    %v313 = vpack.c.b16 %v205, %v203
    %v314 = vpack.c.b16 %v208, %v206
    %v315 = vpack.c.b16 %v209, %v207
    %v316 = vpack.c.b16 %v212, %v210
    %v317 = vpack.c.b16 %v213, %v211
    %v318 = vpack.c.b16 %v216, %v214
    %v319 = vpack.c.b16 %v217, %v215
    %v320 = vpack.c.b16 %v220, %v218
    %v321 = vpack.c.b16 %v221, %v219
    %v322 = vpack.c.b16 %v224, %v222
    %v323 = vpack.c.b16 %v225, %v223
    %v324 = vpack.c.b16 %v228, %v226
    %v325 = vpack.c.b16 %v229, %v227
    %v326 = vpack.c.b16 %v232, %v230
    %v327 = vpack.c.b16 %v233, %v231
    %v328 = vpack.c.b16 %v236, %v234
    %v329 = vpack.c.b16 %v237, %v235
    %v330 = vpack.c.b16 %v240, %v238
    %v331 = vpack.c.b16 %v241, %v239
    %v332 = vpack.c.b16 %v244, %v242
    %v333 = vpack.c.b16 %v245, %v243
    %v334 = vpack.c.b16 %v248, %v246
    %v335 = vpack.c.b16 %v249, %v247
    %v336 = vpack.c.b16 %v252, %v250
    %v337 = vpack.c.b16 %v253, %v251
    %v338 = vpack.c.b16 %v256, %v254
    %v339 = vpack.c.b16 %v257, %v255
    %v340 = vpack.c.b16 %v260, %v258
    %v341 = vpack.c.b16 %v261, %v259
    %v342 = vpack.c.b16 %v264, %v262
    %v343 = vpack.c.b16 %v265, %v263
    %v344 = vpack.c.b16 %v268, %v266
    %v345 = vpack.c.b16 %v269, %v267
    %v346 = vpack.c.b16 %v272, %v270
    %v347 = vpack.c.b16 %v273, %v271
    %v348 = vpack.c.b16 %v276, %v274
    %v349 = vpack.c.b16 %v277, %v275
    %v350 = vpack.c.b16 %v280, %v278
    %v351 = vpack.c.b16 %v281, %v279
    %v352 = vpack.c.b16 %v284, %v282
    %v353 = vpack.c.b16 %v285, %v283
    %v354 = vpack.c.b16 %v288, %v286
    %v355 = vpack.c.b16 %v289, %v287
    %v356 = vpack.c.b16 %v292, %v290
    %v357 = vpack.c.b16 %v293, %v291
    %v409 = vunpack.c.l.b16 %v83
    %v410 = vunpack.c.l.b16 %v84
    %v411 = vunpack.c.l.b16 %v85
    %v412 = vunpack.c.l.b16 %v86
    %v413 = vunpack.c.l.b16 %v87
    %v414 = vunpack.c.l.b16 %v88
    %v415 = vunpack.c.l.b16 %v89
    %v416 = vunpack.c.l.b16 %v90
    %v417 = vunpack.c.l.b16 %v91
    %v418 = vunpack.c.l.b16 %v92
    %v419 = vunpack.c.l.b16 %v93
    %v420 = vunpack.c.l.b16 %v94
    %v421 = vunpack.c.l.b16 %v95
    %v422 = vunpack.c.l.b16 %v96
    %v423 = vunpack.c.l.b16 %v97
    %v424 = vunpack.c.l.b16 %v98
    %v425 = vunpack.c.l.b16 %v99
    %v426 = vunpack.c.l.b16 %v100
    %v427 = vunpack.c.l.b16 %v101
    %v428 = vpack.c.b16 %v410, %v409
    %v429 = vpack.c.b16 %v412, %v411
    %v430 = vpack.c.b16 %v414, %v413
    %v431 = vpack.c.b16 %v416, %v415
    %v432 = vpack.c.b16 %v418, %v417
    %v433 = vpack.c.b16 %v420, %v419
    %v434 = vpack.c.b16 %v422, %v421
    %v435 = vpack.c.b16 %v424, %v423
    %v436 = vpack.c.b16 %v426, %v425
    %v437 = vpack.c.b16 %v427, %v427
    %vm447 = vcmask 154624
    %v449 = vsel %vm447, %v295, 0
    %v452 = vsel %vm447, %v297, 0
    %v455 = vsel %vm447, %v299, 0
    %v458 = vsel %vm447, %v301, 0
    %v461 = vsel %vm447, %v303, 0
    %v464 = vsel %vm447, %v305, 0
    %v467 = vsel %vm447, %v307, 0
    %v470 = vsel %vm447, %v309, 0
    %v473 = vsel %vm447, %v311, 0
    %v476 = vsel %vm447, %v313, 0
    %v479 = vsel %vm447, %v315, 0
    %v482 = vsel %vm447, %v317, 0
    %v485 = vsel %vm447, %v319, 0
    %v488 = vsel %vm447, %v321, 0
    %v491 = vsel %vm447, %v323, 0
    %v494 = vsel %vm447, %v325, 0
    %v497 = vsel %vm447, %v327, 0
    %v500 = vsel %vm447, %v329, 0
    %v503 = vsel %vm447, %v331, 0
    %v506 = vsel %vm447, %v333, 0
    %v509 = vsel %vm447, %v335, 0
    %v512 = vsel %vm447, %v337, 0
    %v515 = vsel %vm447, %v339, 0
    %v518 = vsel %vm447, %v341, 0
    %v521 = vsel %vm447, %v343, 0
    %v524 = vsel %vm447, %v345, 0
    %v527 = vsel %vm447, %v347, 0
    %v530 = vsel %vm447, %v349, 0
    %v533 = vsel %vm447, %v351, 0
    %v536 = vsel %vm447, %v353, 0
    %v539 = vsel %vm447, %v355, 0
    %v542 = vsel %vm447, %v357, 0
    %vm544 = vcmask 1040384
    %vm545 = vcmask 1041408
    %v546 = vsel %vm544, 4294967295, 65535
    %v547 = vsel %vm545, %v546, 0
    %v549 = vand.u32 %v437, %v547
    %551 = vmatprep.subr.bf16.mxu0 0
    %552 = vmatpush1.bf16.msra.mxu0 %v428
    %553 = vmatprep.subr.bf16.mxu0 0
    %554 = vmatpush1.bf16.msra.mxu0 %v429
    %555 = vmatprep.subr.bf16.mxu0 0
    %556 = vmatpush1.bf16.msra.mxu0 %v430
    %557 = vmatprep.subr.bf16.mxu0 0
    %558 = vmatpush1.bf16.msra.mxu0 %v431
    %559 = vmatprep.subr.bf16.mxu0 0
    %560 = vmatpush1.bf16.msra.mxu0 %v432
    %561 = vmatprep.subr.bf16.mxu0 0
    %562 = vmatpush1.bf16.msra.mxu0 %v433
    %563 = vmatprep.subr.bf16.mxu0 0
    %564 = vmatpush1.bf16.msra.mxu0 %v434
    %565 = vmatprep.subr.bf16.mxu0 0
    %566 = vmatpush1.bf16.msra.mxu0 %v435
    %567 = vmatprep.subr.bf16.mxu0 0
    %568 = vmatpush1.bf16.msra.mxu0 %v436
    %569 = vmatprep.subr.bf16.mxu0 0
    %570 = vmatpush1.bf16.msra.mxu0 %v549
    %571 = vmatprep.subr.bf16.mxu0 0
    %572 = vmatpush1.bf16.msra.mxu0 0
    %573 = vmatprep.subr.bf16.mxu0 0
    %574 = vmatpush1.bf16.msra.mxu0 0
    %575 = vmatprep.subr.bf16.mxu0 0
    %576 = vmatpush1.bf16.msra.mxu0 0
    %577 = vmatprep.subr.bf16.mxu0 0
    %578 = vmatpush1.bf16.msra.mxu0 0
    %579 = vmatprep.subr.bf16.mxu0 0
    %580 = vmatpush1.bf16.msra.mxu0 0
    %581 = vmatprep.subr.bf16.mxu0 0
    %582 = vmatpush1.bf16.msra.mxu0 0
    %583 = vmatprep.mubr.bf16.mxu0 %v449
    %584 = vmatmul.mubr.bf16.gmra.mrb[0].mxu0 %v294
    %v585 = vpop.f32.mrb[0].mxu0
    %v586 = vadd.f32 0.0, %v585
    %v587 = vpop.f32.mrb[0].mxu0
    %v588 = vpop.f32.mrb[0].mxu0
    %v589 = vadd.f32 0.0, %v588
    %v590 = vpop.f32.mrb[0].mxu0
    %591 = vmatprep.mubr.bf16.mxu0 %v452
    %592 = vmatmul.mubr.bf16.gmra.mrb[0].mxu0 %v296
    %v593 = vpop.f32.mrb[0].mxu0
    %v594 = vadd.f32 0.0, %v593
    %v595 = vpop.f32.mrb[0].mxu0
    %v596 = vpop.f32.mrb[0].mxu0
    %v597 = vadd.f32 0.0, %v596
    %v598 = vpop.f32.mrb[0].mxu0
    %599 = vmatprep.mubr.bf16.mxu0 %v455
    %600 = vmatmul.mubr.bf16.gmra.mrb[0].mxu0 %v298
    %v601 = vpop.f32.mrb[0].mxu0
    %v602 = vadd.f32 0.0, %v601
    %v603 = vpop.f32.mrb[0].mxu0
    %v604 = vpop.f32.mrb[0].mxu0
    %v605 = vadd.f32 0.0, %v604
    %v606 = vpop.f32.mrb[0].mxu0
    %607 = vmatprep.mubr.bf16.mxu0 %v458
    %608 = vmatmul.mubr.bf16.gmra.mrb[0].mxu0 %v300
    %v609 = vpop.f32.mrb[0].mxu0
    %v610 = vadd.f32 0.0, %v609
    %v611 = vpop.f32.mrb[0].mxu0
    %v612 = vpop.f32.mrb[0].mxu0
    %v613 = vadd.f32 0.0, %v612
    %v614 = vpop.f32.mrb[0].mxu0
    %615 = vmatprep.mubr.bf16.mxu0 %v461
    %616 = vmatmul.mubr.bf16.gmra.mrb[0].mxu0 %v302
    %v617 = vpop.f32.mrb[0].mxu0
    %v618 = vadd.f32 0.0, %v617
    %v619 = vpop.f32.mrb[0].mxu0
    %v620 = vpop.f32.mrb[0].mxu0
    %v621 = vadd.f32 0.0, %v620
    %v622 = vpop.f32.mrb[0].mxu0
    %623 = vmatprep.mubr.bf16.mxu0 %v464
    %624 = vmatmul.mubr.bf16.gmra.mrb[0].mxu0 %v304
    %v625 = vpop.f32.mrb[0].mxu0
    %v626 = vadd.f32 0.0, %v625
    %v627 = vpop.f32.mrb[0].mxu0
    %v628 = vpop.f32.mrb[0].mxu0
    %v629 = vadd.f32 0.0, %v628
    %v630 = vpop.f32.mrb[0].mxu0
    %631 = vmatprep.mubr.bf16.mxu0 %v467
    %632 = vmatmul.mubr.bf16.gmra.mrb[0].mxu0 %v306
    %v633 = vpop.f32.mrb[0].mxu0
    %v634 = vadd.f32 0.0, %v633
    %v635 = vpop.f32.mrb[0].mxu0
    %v636 = vpop.f32.mrb[0].mxu0
    %v637 = vadd.f32 0.0, %v636
    %v638 = vpop.f32.mrb[0].mxu0
    %639 = vmatprep.mubr.bf16.mxu0 %v470
    %640 = vmatmul.mubr.bf16.gmra.mrb[0].mxu0 %v308
    %v641 = vpop.f32.mrb[0].mxu0
    %v642 = vadd.f32 0.0, %v641
    %v643 = vpop.f32.mrb[0].mxu0
    %v644 = vpop.f32.mrb[0].mxu0
    %v645 = vadd.f32 0.0, %v644
    %v646 = vpop.f32.mrb[0].mxu0
    %647 = vmatprep.mubr.bf16.mxu0 %v473
    %648 = vmatmul.mubr.bf16.gmra.mrb[0].mxu0 %v310
    %v649 = vpop.f32.mrb[0].mxu0
    %v650 = vadd.f32 0.0, %v649
    %v651 = vpop.f32.mrb[0].mxu0
    %v652 = vpop.f32.mrb[0].mxu0
    %v653 = vadd.f32 0.0, %v652
    %v654 = vpop.f32.mrb[0].mxu0
    %655 = vmatprep.mubr.bf16.mxu0 %v476
    %656 = vmatmul.mubr.bf16.gmra.mrb[0].mxu0 %v312
    %v657 = vpop.f32.mrb[0].mxu0
    %v658 = vadd.f32 0.0, %v657
    %v659 = vpop.f32.mrb[0].mxu0
    %v660 = vpop.f32.mrb[0].mxu0
    %v661 = vadd.f32 0.0, %v660
    %v662 = vpop.f32.mrb[0].mxu0
    %663 = vmatprep.mubr.bf16.mxu0 %v479
    %664 = vmatmul.mubr.bf16.gmra.mrb[0].mxu0 %v314
    %v665 = vpop.f32.mrb[0].mxu0
    %v666 = vadd.f32 0.0, %v665
    %v667 = vpop.f32.mrb[0].mxu0
    %v668 = vpop.f32.mrb[0].mxu0
    %v669 = vadd.f32 0.0, %v668
    %v670 = vpop.f32.mrb[0].mxu0
    %671 = vmatprep.mubr.bf16.mxu0 %v482
    %672 = vmatmul.mubr.bf16.gmra.mrb[0].mxu0 %v316
    %v673 = vpop.f32.mrb[0].mxu0
    %v674 = vadd.f32 0.0, %v673
    %v675 = vpop.f32.mrb[0].mxu0
    %v676 = vpop.f32.mrb[0].mxu0
    %v677 = vadd.f32 0.0, %v676
    %v678 = vpop.f32.mrb[0].mxu0
    %679 = vmatprep.mubr.bf16.mxu0 %v485
    %680 = vmatmul.mubr.bf16.gmra.mrb[0].mxu0 %v318
    %v681 = vpop.f32.mrb[0].mxu0
    %v682 = vadd.f32 0.0, %v681
    %v683 = vpop.f32.mrb[0].mxu0
    %v684 = vpop.f32.mrb[0].mxu0
    %v685 = vadd.f32 0.0, %v684
    %v686 = vpop.f32.mrb[0].mxu0
    %687 = vmatprep.mubr.bf16.mxu0 %v488
    %688 = vmatmul.mubr.bf16.gmra.mrb[0].mxu0 %v320
    %v689 = vpop.f32.mrb[0].mxu0
    %v690 = vadd.f32 0.0, %v689
    %v691 = vpop.f32.mrb[0].mxu0
    %v692 = vpop.f32.mrb[0].mxu0
    %v693 = vadd.f32 0.0, %v692
    %v694 = vpop.f32.mrb[0].mxu0
    %695 = vmatprep.mubr.bf16.mxu0 %v491
    %696 = vmatmul.mubr.bf16.gmra.mrb[0].mxu0 %v322
    %v697 = vpop.f32.mrb[0].mxu0
    %v698 = vadd.f32 0.0, %v697
    %v699 = vpop.f32.mrb[0].mxu0
    %v700 = vpop.f32.mrb[0].mxu0
    %v701 = vadd.f32 0.0, %v700
    %v702 = vpop.f32.mrb[0].mxu0
    %703 = vmatprep.mubr.bf16.mxu0 %v494
    %704 = vmatmul.mubr.bf16.gmra.mrb[0].mxu0 %v324
    %v705 = vpop.f32.mrb[0].mxu0
    %v706 = vadd.f32 0.0, %v705
    %v707 = vpop.f32.mrb[0].mxu0
    %v708 = vpop.f32.mrb[0].mxu0
    %v709 = vadd.f32 0.0, %v708
    %v710 = vpop.f32.mrb[0].mxu0
    %711 = vmatprep.mubr.bf16.mxu0 %v497
    %712 = vmatmul.mubr.bf16.gmra.mrb[0].mxu0 %v326
    %v713 = vpop.f32.mrb[0].mxu0
    %v714 = vadd.f32 0.0, %v713
    %v715 = vpop.f32.mrb[0].mxu0
    %v716 = vpop.f32.mrb[0].mxu0
    %v717 = vadd.f32 0.0, %v716
    %v718 = vpop.f32.mrb[0].mxu0
    %719 = vmatprep.mubr.bf16.mxu0 %v500
    %720 = vmatmul.mubr.bf16.gmra.mrb[0].mxu0 %v328
    %v721 = vpop.f32.mrb[0].mxu0
    %v722 = vadd.f32 0.0, %v721
    %v723 = vpop.f32.mrb[0].mxu0
    %v724 = vpop.f32.mrb[0].mxu0
    %v725 = vadd.f32 0.0, %v724
    %v726 = vpop.f32.mrb[0].mxu0
    %727 = vmatprep.mubr.bf16.mxu0 %v503
    %728 = vmatmul.mubr.bf16.gmra.mrb[0].mxu0 %v330
    %v729 = vpop.f32.mrb[0].mxu0
    %v730 = vadd.f32 0.0, %v729
    %v731 = vpop.f32.mrb[0].mxu0
    %v732 = vpop.f32.mrb[0].mxu0
    %v733 = vadd.f32 0.0, %v732
    %v734 = vpop.f32.mrb[0].mxu0
    %735 = vmatprep.mubr.bf16.mxu0 %v506
    %736 = vmatmul.mubr.bf16.gmra.mrb[0].mxu0 %v332
    %v737 = vpop.f32.mrb[0].mxu0
    %v738 = vadd.f32 0.0, %v737
    %v739 = vpop.f32.mrb[0].mxu0
    %v740 = vpop.f32.mrb[0].mxu0
    %v741 = vadd.f32 0.0, %v740
    %v742 = vpop.f32.mrb[0].mxu0
    %743 = vmatprep.mubr.bf16.mxu0 %v509
    %744 = vmatmul.mubr.bf16.gmra.mrb[0].mxu0 %v334
    %v745 = vpop.f32.mrb[0].mxu0
    %v746 = vadd.f32 0.0, %v745
    %v747 = vpop.f32.mrb[0].mxu0
    %v748 = vpop.f32.mrb[0].mxu0
    %v749 = vadd.f32 0.0, %v748
    %v750 = vpop.f32.mrb[0].mxu0
    %751 = vmatprep.mubr.bf16.mxu0 %v512
    %752 = vmatmul.mubr.bf16.gmra.mrb[0].mxu0 %v336
    %v753 = vpop.f32.mrb[0].mxu0
    %v754 = vadd.f32 0.0, %v753
    %v755 = vpop.f32.mrb[0].mxu0
    %v756 = vpop.f32.mrb[0].mxu0
    %v757 = vadd.f32 0.0, %v756
    %v758 = vpop.f32.mrb[0].mxu0
    %759 = vmatprep.mubr.bf16.mxu0 %v515
    %760 = vmatmul.mubr.bf16.gmra.mrb[0].mxu0 %v338
    %v761 = vpop.f32.mrb[0].mxu0
    %v762 = vadd.f32 0.0, %v761
    %v763 = vpop.f32.mrb[0].mxu0
    %v764 = vpop.f32.mrb[0].mxu0
    %v765 = vadd.f32 0.0, %v764
    %v766 = vpop.f32.mrb[0].mxu0
    %767 = vmatprep.mubr.bf16.mxu0 %v518
    %768 = vmatmul.mubr.bf16.gmra.mrb[0].mxu0 %v340
    %v769 = vpop.f32.mrb[0].mxu0
    %v770 = vadd.f32 0.0, %v769
    %v771 = vpop.f32.mrb[0].mxu0
    %v772 = vpop.f32.mrb[0].mxu0
    %v773 = vadd.f32 0.0, %v772
    %v774 = vpop.f32.mrb[0].mxu0
    %775 = vmatprep.mubr.bf16.mxu0 %v521
    %776 = vmatmul.mubr.bf16.gmra.mrb[0].mxu0 %v342
    %v777 = vpop.f32.mrb[0].mxu0
    %v778 = vadd.f32 0.0, %v777
    %v779 = vpop.f32.mrb[0].mxu0
    %v780 = vpop.f32.mrb[0].mxu0
    %v781 = vadd.f32 0.0, %v780
    %v782 = vpop.f32.mrb[0].mxu0
    %783 = vmatprep.mubr.bf16.mxu0 %v524
    %784 = vmatmul.mubr.bf16.gmra.mrb[0].mxu0 %v344
    %v785 = vpop.f32.mrb[0].mxu0
    %v786 = vadd.f32 0.0, %v785
    %v787 = vpop.f32.mrb[0].mxu0
    %v788 = vpop.f32.mrb[0].mxu0
    %v789 = vadd.f32 0.0, %v788
    %v790 = vpop.f32.mrb[0].mxu0
    %791 = vmatprep.mubr.bf16.mxu0 %v527
    %792 = vmatmul.mubr.bf16.gmra.mrb[0].mxu0 %v346
    %v793 = vpop.f32.mrb[0].mxu0
    %v794 = vadd.f32 0.0, %v793
    %v795 = vpop.f32.mrb[0].mxu0
    %v796 = vpop.f32.mrb[0].mxu0
    %v797 = vadd.f32 0.0, %v796
    %v798 = vpop.f32.mrb[0].mxu0
    %799 = vmatprep.mubr.bf16.mxu0 %v530
    %800 = vmatmul.mubr.bf16.gmra.mrb[0].mxu0 %v348
    %v801 = vpop.f32.mrb[0].mxu0
    %v802 = vadd.f32 0.0, %v801
    %v803 = vpop.f32.mrb[0].mxu0
    %v804 = vpop.f32.mrb[0].mxu0
    %v805 = vadd.f32 0.0, %v804
    %v806 = vpop.f32.mrb[0].mxu0
    %807 = vmatprep.mubr.bf16.mxu0 %v533
    %808 = vmatmul.mubr.bf16.gmra.mrb[0].mxu0 %v350
    %v809 = vpop.f32.mrb[0].mxu0
    %v810 = vadd.f32 0.0, %v809
    %v811 = vpop.f32.mrb[0].mxu0
    %v812 = vpop.f32.mrb[0].mxu0
    %v813 = vadd.f32 0.0, %v812
    %v814 = vpop.f32.mrb[0].mxu0
    %815 = vmatprep.mubr.bf16.mxu0 %v536
    %816 = vmatmul.mubr.bf16.gmra.mrb[0].mxu0 %v352
    %v817 = vpop.f32.mrb[0].mxu0
    %v818 = vadd.f32 0.0, %v817
    %v819 = vpop.f32.mrb[0].mxu0
    %v820 = vpop.f32.mrb[0].mxu0
    %v821 = vadd.f32 0.0, %v820
    %v822 = vpop.f32.mrb[0].mxu0
    %823 = vmatprep.mubr.bf16.mxu0 %v539
    %824 = vmatmul.mubr.bf16.gmra.mrb[0].mxu0 %v354
    %v825 = vpop.f32.mrb[0].mxu0
    %v826 = vadd.f32 0.0, %v825
    %v827 = vpop.f32.mrb[0].mxu0
    %v828 = vpop.f32.mrb[0].mxu0
    %v829 = vadd.f32 0.0, %v828
    %v830 = vpop.f32.mrb[0].mxu0
    %831 = vmatprep.mubr.bf16.mxu0 %v542
    %832 = vmatmul.mubr.bf16.gmra.mrb[0].mxu0 %v356
    %v833 = vpop.f32.mrb[0].mxu0
    %v834 = vadd.f32 0.0, %v833
    %v835 = vpop.f32.mrb[0].mxu0
    %v836 = vpop.f32.mrb[0].mxu0
    %v837 = vadd.f32 0.0, %v836
    %v838 = vpop.f32.mrb[0].mxu0
    %839 = vdwg.mxu0
    %p840 = scmp.eq.s32.totalorder 0, 0
    // Predicated region
    $region18: #{fused_matmul.1} parent=1 // pred_check
      %p841 = pneg %p840
    $region19: #{fused_matmul.1} parent=1 // pred_check_branch
      %843 = sbr.rel (%p841) target = $region21
    $region20: #{fused_matmul.1} parent=1 // pred_region
      %844 = vst [vmem:[#allocation2] sm:$0xff] %v586
      %845 = vst [vmem:[#allocation2 + $0x8] sm:$0xff] %v589
      %846 = vst [vmem:[#allocation2 + $0x10] sm:$0xff] %v594
      %847 = vst [vmem:[#allocation2 + $0x18] sm:$0xff] %v597
      %848 = vst [vmem:[#allocation2 + $0x20] sm:$0xff] %v602
      %849 = vst [vmem:[#allocation2 + $0x28] sm:$0xff] %v605
      %850 = vst [vmem:[#allocation2 + $0x30] sm:$0xff] %v610
      %851 = vst [vmem:[#allocation2 + $0x38] sm:$0xff] %v613
      %852 = vst [vmem:[#allocation2 + $0x40] sm:$0xff] %v618
      %853 = vst [vmem:[#allocation2 + $0x48] sm:$0xff] %v621
      %854 = vst [vmem:[#allocation2 + $0x50] sm:$0xff] %v626
      %855 = vst [vmem:[#allocation2 + $0x58] sm:$0xff] %v629
      %856 = vst [vmem:[#allocation2 + $0x60] sm:$0xff] %v634
      %857 = vst [vmem:[#allocation2 + $0x68] sm:$0xff] %v637
      %858 = vst [vmem:[#allocation2 + $0x70] sm:$0xff] %v642
      %859 = vst [vmem:[#allocation2 + $0x78] sm:$0xff] %v645
      %860 = vst [vmem:[#allocation2 + $0x80] sm:$0xff] %v650
      %861 = vst [vmem:[#allocation2 + $0x88] sm:$0xff] %v653
      %862 = vst [vmem:[#allocation2 + $0x90] sm:$0xff] %v658
      %863 = vst [vmem:[#allocation2 + $0x98] sm:$0xff] %v661
      %864 = vst [vmem:[#allocation2 + $0xa0] sm:$0xff] %v666
      %865 = vst [vmem:[#allocation2 + $0xa8] sm:$0xff] %v669
      %866 = vst [vmem:[#allocation2 + $0xb0] sm:$0xff] %v674
      %867 = vst [vmem:[#allocation2 + $0xb8] sm:$0xff] %v677
      %868 = vst [vmem:[#allocation2 + $0xc0] sm:$0xff] %v682
      %869 = vst [vmem:[#allocation2 + $0xc8] sm:$0xff] %v685
      %870 = vst [vmem:[#allocation2 + $0xd0] sm:$0xff] %v690
      %871 = vst [vmem:[#allocation2 + $0xd8] sm:$0xff] %v693
      %872 = vst [vmem:[#allocation2 + $0xe0] sm:$0xff] %v698
      %873 = vst [vmem:[#allocation2 + $0xe8] sm:$0xff] %v701
      %874 = vst [vmem:[#allocation2 + $0xf0] sm:$0xff] %v706
      %875 = vst [vmem:[#allocation2 + $0xf8] sm:$0xff] %v709
      %876 = vst [vmem:[#allocation2 + $0x100] sm:$0xff] %v714
      %877 = vst [vmem:[#allocation2 + $0x108] sm:$0xff] %v717
      %878 = vst [vmem:[#allocation2 + $0x110] sm:$0xff] %v722
      %879 = vst [vmem:[#allocation2 + $0x118] sm:$0xff] %v725
      %880 = vst [vmem:[#allocation2 + $0x120] sm:$0xff] %v730
      %881 = vst [vmem:[#allocation2 + $0x128] sm:$0xff] %v733
      %882 = vst [vmem:[#allocation2 + $0x130] sm:$0xff] %v738
      %883 = vst [vmem:[#allocation2 + $0x138] sm:$0xff] %v741
      %884 = vst [vmem:[#allocation2 + $0x140] sm:$0xff] %v746
      %885 = vst [vmem:[#allocation2 + $0x148] sm:$0xff] %v749
      %886 = vst [vmem:[#allocation2 + $0x150] sm:$0xff] %v754
      %887 = vst [vmem:[#allocation2 + $0x158] sm:$0xff] %v757
      %888 = vst [vmem:[#allocation2 + $0x160] sm:$0xff] %v762
      %889 = vst [vmem:[#allocation2 + $0x168] sm:$0xff] %v765
      %890 = vst [vmem:[#allocation2 + $0x170] sm:$0xff] %v770
      %891 = vst [vmem:[#allocation2 + $0x178] sm:$0xff] %v773
      %892 = vst [vmem:[#allocation2 + $0x180] sm:$0xff] %v778
      %893 = vst [vmem:[#allocation2 + $0x188] sm:$0xff] %v781
      %894 = vst [vmem:[#allocation2 + $0x190] sm:$0xff] %v786
      %895 = vst [vmem:[#allocation2 + $0x198] sm:$0xff] %v789
      %896 = vst [vmem:[#allocation2 + $0x1a0] sm:$0xff] %v794
      %897 = vst [vmem:[#allocation2 + $0x1a8] sm:$0xff] %v797
      %898 = vst [vmem:[#allocation2 + $0x1b0] sm:$0xff] %v802
      %899 = vst [vmem:[#allocation2 + $0x1b8] sm:$0xff] %v805
      %900 = vst [vmem:[#allocation2 + $0x1c0] sm:$0xff] %v810
      %901 = vst [vmem:[#allocation2 + $0x1c8] sm:$0xff] %v813
      %902 = vst [vmem:[#allocation2 + $0x1d0] sm:$0xff] %v818
      %903 = vst [vmem:[#allocation2 + $0x1d8] sm:$0xff] %v821
      %904 = vst [vmem:[#allocation2 + $0x1e0] sm:$0xff] %v826
      %905 = vst [vmem:[#allocation2 + $0x1e8] sm:$0xff] %v829
      %906 = vst [vmem:[#allocation2 + $0x1f0] sm:$0xff] %v834
      %907 = vst [vmem:[#allocation2 + $0x1f8] sm:$0xff] %v837
    $region21: #{fused_matmul.1} parent=1 // pred_fallthru
      _
    %p908 = scmp.ne.s32.totalorder 0, 0
    // Predicated region
    $region22: #{fused_matmul.1} parent=1 // pred_check
      %p909 = pneg %p908
    $region23: #{fused_matmul.1} parent=1 // pred_check_branch
      %911 = sbr.rel (%p909) target = $region25
    $region24: #{fused_matmul.1} parent=1 // pred_region
      %v912 = vld [vmem:[#allocation2] sm:$0xff]
      %v913 = vld [vmem:[#allocation2 + $0x8] sm:$0xff]
      %v914 = vld [vmem:[#allocation2 + $0x10] sm:$0xff]
      %v915 = vld [vmem:[#allocation2 + $0x18] sm:$0xff]
      %v916 = vld [vmem:[#allocation2 + $0x20] sm:$0xff]
      %v917 = vld [vmem:[#allocation2 + $0x28] sm:$0xff]
      %v918 = vld [vmem:[#allocation2 + $0x30] sm:$0xff]
      %v919 = vld [vmem:[#allocation2 + $0x38] sm:$0xff]
      %v920 = vld [vmem:[#allocation2 + $0x40] sm:$0xff]
      %v921 = vld [vmem:[#allocation2 + $0x48] sm:$0xff]
      %v922 = vld [vmem:[#allocation2 + $0x50] sm:$0xff]
      %v923 = vld [vmem:[#allocation2 + $0x58] sm:$0xff]
      %v924 = vld [vmem:[#allocation2 + $0x60] sm:$0xff]
      %v925 = vld [vmem:[#allocation2 + $0x68] sm:$0xff]
      %v926 = vld [vmem:[#allocation2 + $0x70] sm:$0xff]
      %v927 = vld [vmem:[#allocation2 + $0x78] sm:$0xff]
      %v928 = vld [vmem:[#allocation2 + $0x80] sm:$0xff]
      %v929 = vld [vmem:[#allocation2 + $0x88] sm:$0xff]
      %v930 = vld [vmem:[#allocation2 + $0x90] sm:$0xff]
      %v931 = vld [vmem:[#allocation2 + $0x98] sm:$0xff]
      %v932 = vld [vmem:[#allocation2 + $0xa0] sm:$0xff]
      %v933 = vld [vmem:[#allocation2 + $0xa8] sm:$0xff]
      %v934 = vld [vmem:[#allocation2 + $0xb0] sm:$0xff]
      %v935 = vld [vmem:[#allocation2 + $0xb8] sm:$0xff]
      %v936 = vld [vmem:[#allocation2 + $0xc0] sm:$0xff]
      %v937 = vld [vmem:[#allocation2 + $0xc8] sm:$0xff]
      %v938 = vld [vmem:[#allocation2 + $0xd0] sm:$0xff]
      %v939 = vld [vmem:[#allocation2 + $0xd8] sm:$0xff]
      %v940 = vld [vmem:[#allocation2 + $0xe0] sm:$0xff]
      %v941 = vld [vmem:[#allocation2 + $0xe8] sm:$0xff]
      %v942 = vld [vmem:[#allocation2 + $0xf0] sm:$0xff]
      %v943 = vld [vmem:[#allocation2 + $0xf8] sm:$0xff]
      %v944 = vld [vmem:[#allocation2 + $0x100] sm:$0xff]
      %v945 = vld [vmem:[#allocation2 + $0x108] sm:$0xff]
      %v946 = vld [vmem:[#allocation2 + $0x110] sm:$0xff]
      %v947 = vld [vmem:[#allocation2 + $0x118] sm:$0xff]
      %v948 = vld [vmem:[#allocation2 + $0x120] sm:$0xff]
      %v949 = vld [vmem:[#allocation2 + $0x128] sm:$0xff]
      %v950 = vld [vmem:[#allocation2 + $0x130] sm:$0xff]
      %v951 = vld [vmem:[#allocation2 + $0x138] sm:$0xff]
      %v952 = vld [vmem:[#allocation2 + $0x140] sm:$0xff]
      %v953 = vld [vmem:[#allocation2 + $0x148] sm:$0xff]
      %v954 = vld [vmem:[#allocation2 + $0x150] sm:$0xff]
      %v955 = vld [vmem:[#allocation2 + $0x158] sm:$0xff]
      %v956 = vld [vmem:[#allocation2 + $0x160] sm:$0xff]
      %v957 = vld [vmem:[#allocation2 + $0x168] sm:$0xff]
      %v958 = vld [vmem:[#allocation2 + $0x170] sm:$0xff]
      %v959 = vld [vmem:[#allocation2 + $0x178] sm:$0xff]
      %v960 = vld [vmem:[#allocation2 + $0x180] sm:$0xff]
      %v961 = vld [vmem:[#allocation2 + $0x188] sm:$0xff]
      %v962 = vld [vmem:[#allocation2 + $0x190] sm:$0xff]
      %v963 = vld [vmem:[#allocation2 + $0x198] sm:$0xff]
      %v964 = vld [vmem:[#allocation2 + $0x1a0] sm:$0xff]
      %v965 = vld [vmem:[#allocation2 + $0x1a8] sm:$0xff]
      %v966 = vld [vmem:[#allocation2 + $0x1b0] sm:$0xff]
      %v967 = vld [vmem:[#allocation2 + $0x1b8] sm:$0xff]
      %v968 = vld [vmem:[#allocation2 + $0x1c0] sm:$0xff]
      %v969 = vld [vmem:[#allocation2 + $0x1c8] sm:$0xff]
      %v970 = vld [vmem:[#allocation2 + $0x1d0] sm:$0xff]
      %v971 = vld [vmem:[#allocation2 + $0x1d8] sm:$0xff]
      %v972 = vld [vmem:[#allocation2 + $0x1e0] sm:$0xff]
      %v973 = vld [vmem:[#allocation2 + $0x1e8] sm:$0xff]
      %v974 = vld [vmem:[#allocation2 + $0x1f0] sm:$0xff]
      %v975 = vld [vmem:[#allocation2 + $0x1f8] sm:$0xff]
      %v976 = vadd.f32 %v912, %v586
      %v977 = vadd.f32 %v913, %v589
      %v978 = vadd.f32 %v914, %v594
      %v979 = vadd.f32 %v915, %v597
      %v980 = vadd.f32 %v916, %v602
      %v981 = vadd.f32 %v917, %v605
      %v982 = vadd.f32 %v918, %v610
      %v983 = vadd.f32 %v919, %v613
      %v984 = vadd.f32 %v920, %v618
      %v985 = vadd.f32 %v921, %v621
      %v986 = vadd.f32 %v922, %v626
      %v987 = vadd.f32 %v923, %v629
      %v988 = vadd.f32 %v924, %v634
      %v989 = vadd.f32 %v925, %v637
      %v990 = vadd.f32 %v926, %v642
      %v991 = vadd.f32 %v927, %v645
      %v992 = vadd.f32 %v928, %v650
      %v993 = vadd.f32 %v929, %v653
      %v994 = vadd.f32 %v930, %v658
      %v995 = vadd.f32 %v931, %v661
      %v996 = vadd.f32 %v932, %v666
      %v997 = vadd.f32 %v933, %v669
      %v998 = vadd.f32 %v934, %v674
      %v999 = vadd.f32 %v935, %v677
      %v1000 = vadd.f32 %v936, %v682
      %v1001 = vadd.f32 %v937, %v685
      %v1002 = vadd.f32 %v938, %v690
      %v1003 = vadd.f32 %v939, %v693
      %v1004 = vadd.f32 %v940, %v698
      %v1005 = vadd.f32 %v941, %v701
      %v1006 = vadd.f32 %v942, %v706
      %v1007 = vadd.f32 %v943, %v709
      %v1008 = vadd.f32 %v944, %v714
      %v1009 = vadd.f32 %v945, %v717
      %v1010 = vadd.f32 %v946, %v722
      %v1011 = vadd.f32 %v947, %v725
      %v1012 = vadd.f32 %v948, %v730
      %v1013 = vadd.f32 %v949, %v733
      %v1014 = vadd.f32 %v950, %v738
      %v1015 = vadd.f32 %v951, %v741
      %v1016 = vadd.f32 %v952, %v746
      %v1017 = vadd.f32 %v953, %v749
      %v1018 = vadd.f32 %v954, %v754
      %v1019 = vadd.f32 %v955, %v757
      %v1020 = vadd.f32 %v956, %v762
      %v1021 = vadd.f32 %v957, %v765
      %v1022 = vadd.f32 %v958, %v770
      %v1023 = vadd.f32 %v959, %v773
      %v1024 = vadd.f32 %v960, %v778
      %v1025 = vadd.f32 %v961, %v781
      %v1026 = vadd.f32 %v962, %v786
      %v1027 = vadd.f32 %v963, %v789
      %v1028 = vadd.f32 %v964, %v794
      %v1029 = vadd.f32 %v965, %v797
      %v1030 = vadd.f32 %v966, %v802
      %v1031 = vadd.f32 %v967, %v805
      %v1032 = vadd.f32 %v968, %v810
      %v1033 = vadd.f32 %v969, %v813
      %v1034 = vadd.f32 %v970, %v818
      %v1035 = vadd.f32 %v971, %v821
      %v1036 = vadd.f32 %v972, %v826
      %v1037 = vadd.f32 %v973, %v829
      %v1038 = vadd.f32 %v974, %v834
      %v1039 = vadd.f32 %v975, %v837
      %1040 = vst [vmem:[#allocation2] sm:$0xff] %v976
      %1041 = vst [vmem:[#allocation2 + $0x8] sm:$0xff] %v977
      %1042 = vst [vmem:[#allocation2 + $0x10] sm:$0xff] %v978
      %1043 = vst [vmem:[#allocation2 + $0x18] sm:$0xff] %v979
      %1044 = vst [vmem:[#allocation2 + $0x20] sm:$0xff] %v980
      %1045 = vst [vmem:[#allocation2 + $0x28] sm:$0xff] %v981
      %1046 = vst [vmem:[#allocation2 + $0x30] sm:$0xff] %v982
      %1047 = vst [vmem:[#allocation2 + $0x38] sm:$0xff] %v983
      %1048 = vst [vmem:[#allocation2 + $0x40] sm:$0xff] %v984
      %1049 = vst [vmem:[#allocation2 + $0x48] sm:$0xff] %v985
      %1050 = vst [vmem:[#allocation2 + $0x50] sm:$0xff] %v986
      %1051 = vst [vmem:[#allocation2 + $0x58] sm:$0xff] %v987
      %1052 = vst [vmem:[#allocation2 + $0x60] sm:$0xff] %v988
      %1053 = vst [vmem:[#allocation2 + $0x68] sm:$0xff] %v989
      %1054 = vst [vmem:[#allocation2 + $0x70] sm:$0xff] %v990
      %1055 = vst [vmem:[#allocation2 + $0x78] sm:$0xff] %v991
      %1056 = vst [vmem:[#allocation2 + $0x80] sm:$0xff] %v992
      %1057 = vst [vmem:[#allocation2 + $0x88] sm:$0xff] %v993
      %1058 = vst [vmem:[#allocation2 + $0x90] sm:$0xff] %v994
      %1059 = vst [vmem:[#allocation2 + $0x98] sm:$0xff] %v995
      %1060 = vst [vmem:[#allocation2 + $0xa0] sm:$0xff] %v996
      %1061 = vst [vmem:[#allocation2 + $0xa8] sm:$0xff] %v997
      %1062 = vst [vmem:[#allocation2 + $0xb0] sm:$0xff] %v998
      %1063 = vst [vmem:[#allocation2 + $0xb8] sm:$0xff] %v999
      %1064 = vst [vmem:[#allocation2 + $0xc0] sm:$0xff] %v1000
      %1065 = vst [vmem:[#allocation2 + $0xc8] sm:$0xff] %v1001
      %1066 = vst [vmem:[#allocation2 + $0xd0] sm:$0xff] %v1002
      %1067 = vst [vmem:[#allocation2 + $0xd8] sm:$0xff] %v1003
      %1068 = vst [vmem:[#allocation2 + $0xe0] sm:$0xff] %v1004
      %1069 = vst [vmem:[#allocation2 + $0xe8] sm:$0xff] %v1005
      %1070 = vst [vmem:[#allocation2 + $0xf0] sm:$0xff] %v1006
      %1071 = vst [vmem:[#allocation2 + $0xf8] sm:$0xff] %v1007
      %1072 = vst [vmem:[#allocation2 + $0x100] sm:$0xff] %v1008
      %1073 = vst [vmem:[#allocation2 + $0x108] sm:$0xff] %v1009
      %1074 = vst [vmem:[#allocation2 + $0x110] sm:$0xff] %v1010
      %1075 = vst [vmem:[#allocation2 + $0x118] sm:$0xff] %v1011
      %1076 = vst [vmem:[#allocation2 + $0x120] sm:$0xff] %v1012
      %1077 = vst [vmem:[#allocation2 + $0x128] sm:$0xff] %v1013
      %1078 = vst [vmem:[#allocation2 + $0x130] sm:$0xff] %v1014
      %1079 = vst [vmem:[#allocation2 + $0x138] sm:$0xff] %v1015
      %1080 = vst [vmem:[#allocation2 + $0x140] sm:$0xff] %v1016
      %1081 = vst [vmem:[#allocation2 + $0x148] sm:$0xff] %v1017
      %1082 = vst [vmem:[#allocation2 + $0x150] sm:$0xff] %v1018
      %1083 = vst [vmem:[#allocation2 + $0x158] sm:$0xff] %v1019
      %1084 = vst [vmem:[#allocation2 + $0x160] sm:$0xff] %v1020
      %1085 = vst [vmem:[#allocation2 + $0x168] sm:$0xff] %v1021
      %1086 = vst [vmem:[#allocation2 + $0x170] sm:$0xff] %v1022
      %1087 = vst [vmem:[#allocation2 + $0x178] sm:$0xff] %v1023
      %1088 = vst [vmem:[#allocation2 + $0x180] sm:$0xff] %v1024
      %1089 = vst [vmem:[#allocation2 + $0x188] sm:$0xff] %v1025
      %1090 = vst [vmem:[#allocation2 + $0x190] sm:$0xff] %v1026
      %1091 = vst [vmem:[#allocation2 + $0x198] sm:$0xff] %v1027
      %1092 = vst [vmem:[#allocation2 + $0x1a0] sm:$0xff] %v1028
      %1093 = vst [vmem:[#allocation2 + $0x1a8] sm:$0xff] %v1029
      %1094 = vst [vmem:[#allocation2 + $0x1b0] sm:$0xff] %v1030
      %1095 = vst [vmem:[#allocation2 + $0x1b8] sm:$0xff] %v1031
      %1096 = vst [vmem:[#allocation2 + $0x1c0] sm:$0xff] %v1032
      %1097 = vst [vmem:[#allocation2 + $0x1c8] sm:$0xff] %v1033
      %1098 = vst [vmem:[#allocation2 + $0x1d0] sm:$0xff] %v1034
      %1099 = vst [vmem:[#allocation2 + $0x1d8] sm:$0xff] %v1035
      %1100 = vst [vmem:[#allocation2 + $0x1e0] sm:$0xff] %v1036
      %1101 = vst [vmem:[#allocation2 + $0x1e8] sm:$0xff] %v1037
      %1102 = vst [vmem:[#allocation2 + $0x1f0] sm:$0xff] %v1038
      %1103 = vst [vmem:[#allocation2 + $0x1f8] sm:$0xff] %v1039
    $region25: #{fused_matmul.1} parent=1 // pred_fallthru
      _
    // Predicated region
    $region26: #{fused_matmul.1} parent=1 // pred_check
      %p1104 = pneg %p840
    $region27: #{fused_matmul.1} parent=1 // pred_check_branch
      %1106 = sbr.rel (%p1104) target = $region29
    $region28: #{fused_matmul.1} parent=1 // pred_region
      %v1107 = vld [vmem:[#allocation2] sm:$0xff]
      %v1108 = vld [vmem:[#allocation2 + $0x8] sm:$0xff]
      %v1109 = vld [vmem:[#allocation2 + $0x10] sm:$0xff]
      %v1110 = vld [vmem:[#allocation2 + $0x18] sm:$0xff]
      %v1111 = vld [vmem:[#allocation2 + $0x20] sm:$0xff]
      %v1112 = vld [vmem:[#allocation2 + $0x28] sm:$0xff]
      %v1113 = vld [vmem:[#allocation2 + $0x30] sm:$0xff]
      %v1114 = vld [vmem:[#allocation2 + $0x38] sm:$0xff]
      %v1115 = vld [vmem:[#allocation2 + $0x40] sm:$0xff]
      %v1116 = vld [vmem:[#allocation2 + $0x48] sm:$0xff]
      %v1117 = vld [vmem:[#allocation2 + $0x50] sm:$0xff]
      %v1118 = vld [vmem:[#allocation2 + $0x58] sm:$0xff]
      %v1119 = vld [vmem:[#allocation2 + $0x60] sm:$0xff]
      %v1120 = vld [vmem:[#allocation2 + $0x68] sm:$0xff]
      %v1121 = vld [vmem:[#allocation2 + $0x70] sm:$0xff]
      %v1122 = vld [vmem:[#allocation2 + $0x78] sm:$0xff]
      %v1123 = vld [vmem:[#allocation2 + $0x80] sm:$0xff]
      %v1124 = vld [vmem:[#allocation2 + $0x88] sm:$0xff]
      %v1125 = vld [vmem:[#allocation2 + $0x90] sm:$0xff]
      %v1126 = vld [vmem:[#allocation2 + $0x98] sm:$0xff]
      %v1127 = vld [vmem:[#allocation2 + $0xa0] sm:$0xff]
      %v1128 = vld [vmem:[#allocation2 + $0xa8] sm:$0xff]
      %v1129 = vld [vmem:[#allocation2 + $0xb0] sm:$0xff]
      %v1130 = vld [vmem:[#allocation2 + $0xb8] sm:$0xff]
      %v1131 = vld [vmem:[#allocation2 + $0xc0] sm:$0xff]
      %v1132 = vld [vmem:[#allocation2 + $0xc8] sm:$0xff]
      %v1133 = vld [vmem:[#allocation2 + $0xd0] sm:$0xff]
      %v1134 = vld [vmem:[#allocation2 + $0xd8] sm:$0xff]
      %v1135 = vld [vmem:[#allocation2 + $0xe0] sm:$0xff]
      %v1136 = vld [vmem:[#allocation2 + $0xe8] sm:$0xff]
      %v1137 = vld [vmem:[#allocation2 + $0xf0] sm:$0xff]
      %v1138 = vld [vmem:[#allocation2 + $0xf8] sm:$0xff]
      %v1139 = vld [vmem:[#allocation2 + $0x100] sm:$0xff]
      %v1140 = vld [vmem:[#allocation2 + $0x108] sm:$0xff]
      %v1141 = vld [vmem:[#allocation2 + $0x110] sm:$0xff]
      %v1142 = vld [vmem:[#allocation2 + $0x118] sm:$0xff]
      %v1143 = vld [vmem:[#allocation2 + $0x120] sm:$0xff]
      %v1144 = vld [vmem:[#allocation2 + $0x128] sm:$0xff]
      %v1145 = vld [vmem:[#allocation2 + $0x130] sm:$0xff]
      %v1146 = vld [vmem:[#allocation2 + $0x138] sm:$0xff]
      %v1147 = vld [vmem:[#allocation2 + $0x140] sm:$0xff]
      %v1148 = vld [vmem:[#allocation2 + $0x148] sm:$0xff]
      %v1149 = vld [vmem:[#allocation2 + $0x150] sm:$0xff]
      %v1150 = vld [vmem:[#allocation2 + $0x158] sm:$0xff]
      %v1151 = vld [vmem:[#allocation2 + $0x160] sm:$0xff]
      %v1152 = vld [vmem:[#allocation2 + $0x168] sm:$0xff]
      %v1153 = vld [vmem:[#allocation2 + $0x170] sm:$0xff]
      %v1154 = vld [vmem:[#allocation2 + $0x178] sm:$0xff]
      %v1155 = vld [vmem:[#allocation2 + $0x180] sm:$0xff]
      %v1156 = vld [vmem:[#allocation2 + $0x188] sm:$0xff]
      %v1157 = vld [vmem:[#allocation2 + $0x190] sm:$0xff]
      %v1158 = vld [vmem:[#allocation2 + $0x198] sm:$0xff]
      %v1159 = vld [vmem:[#allocation2 + $0x1a0] sm:$0xff]
      %v1160 = vld [vmem:[#allocation2 + $0x1a8] sm:$0xff]
      %v1161 = vld [vmem:[#allocation2 + $0x1b0] sm:$0xff]
      %v1162 = vld [vmem:[#allocation2 + $0x1b8] sm:$0xff]
      %v1163 = vld [vmem:[#allocation2 + $0x1c0] sm:$0xff]
      %v1164 = vld [vmem:[#allocation2 + $0x1c8] sm:$0xff]
      %v1165 = vld [vmem:[#allocation2 + $0x1d0] sm:$0xff]
      %v1166 = vld [vmem:[#allocation2 + $0x1d8] sm:$0xff]
      %v1167 = vld [vmem:[#allocation2 + $0x1e0] sm:$0xff]
      %v1168 = vld [vmem:[#allocation2 + $0x1e8] sm:$0xff]
      %v1169 = vld [vmem:[#allocation2 + $0x1f0] sm:$0xff]
      %v1170 = vld [vmem:[#allocation2 + $0x1f8] sm:$0xff]
      %v1171 = vld [vmem:[%s2] sm:$0x1]
      %v1173 = vlaneseq
      %v1174 = vshrl.u32 %v1173, 7
      %v1175 = vsub.s32 0, %v1174
      %v1176 = vrot.slane %v1171, %v1175
      %v1178 = vmul.f32 %v1107, %v1176
      %v1179 = vmul.f32 %v1108, %v1176
      %v1180 = vmul.f32 %v1109, %v1176
      %v1181 = vmul.f32 %v1110, %v1176
      %v1182 = vmul.f32 %v1111, %v1176
      %v1183 = vmul.f32 %v1112, %v1176
      %v1184 = vmul.f32 %v1113, %v1176
      %v1185 = vmul.f32 %v1114, %v1176
      %v1186 = vmul.f32 %v1115, %v1176
      %v1187 = vmul.f32 %v1116, %v1176
      %v1188 = vmul.f32 %v1117, %v1176
      %v1189 = vmul.f32 %v1118, %v1176
      %v1190 = vmul.f32 %v1119, %v1176
      %v1191 = vmul.f32 %v1120, %v1176
      %v1192 = vmul.f32 %v1121, %v1176
      %v1193 = vmul.f32 %v1122, %v1176
      %v1194 = vmul.f32 %v1123, %v1176
      %v1195 = vmul.f32 %v1124, %v1176
      %v1196 = vmul.f32 %v1125, %v1176
      %v1197 = vmul.f32 %v1126, %v1176
      %v1198 = vmul.f32 %v1127, %v1176
      %v1199 = vmul.f32 %v1128, %v1176
      %v1200 = vmul.f32 %v1129, %v1176
      %v1201 = vmul.f32 %v1130, %v1176
      %v1202 = vmul.f32 %v1131, %v1176
      %v1203 = vmul.f32 %v1132, %v1176
      %v1204 = vmul.f32 %v1133, %v1176
      %v1205 = vmul.f32 %v1134, %v1176
      %v1206 = vmul.f32 %v1135, %v1176
      %v1207 = vmul.f32 %v1136, %v1176
      %v1208 = vmul.f32 %v1137, %v1176
      %v1209 = vmul.f32 %v1138, %v1176
      %v1210 = vmul.f32 %v1139, %v1176
      %v1211 = vmul.f32 %v1140, %v1176
      %v1212 = vmul.f32 %v1141, %v1176
      %v1213 = vmul.f32 %v1142, %v1176
      %v1214 = vmul.f32 %v1143, %v1176
      %v1215 = vmul.f32 %v1144, %v1176
      %v1216 = vmul.f32 %v1145, %v1176
      %v1217 = vmul.f32 %v1146, %v1176
      %v1218 = vmul.f32 %v1147, %v1176
      %v1219 = vmul.f32 %v1148, %v1176
      %v1220 = vmul.f32 %v1149, %v1176
      %v1221 = vmul.f32 %v1150, %v1176
      %v1222 = vmul.f32 %v1151, %v1176
      %v1223 = vmul.f32 %v1152, %v1176
      %v1224 = vmul.f32 %v1153, %v1176
      %v1225 = vmul.f32 %v1154, %v1176
      %v1226 = vmul.f32 %v1155, %v1176
      %v1227 = vmul.f32 %v1156, %v1176
      %v1228 = vmul.f32 %v1157, %v1176
      %v1229 = vmul.f32 %v1158, %v1176
      %v1230 = vmul.f32 %v1159, %v1176
      %v1231 = vmul.f32 %v1160, %v1176
      %v1232 = vmul.f32 %v1161, %v1176
      %v1233 = vmul.f32 %v1162, %v1176
      %v1234 = vmul.f32 %v1163, %v1176
      %v1235 = vmul.f32 %v1164, %v1176
      %v1236 = vmul.f32 %v1165, %v1176
      %v1237 = vmul.f32 %v1166, %v1176
      %v1238 = vmul.f32 %v1167, %v1176
      %v1239 = vmul.f32 %v1168, %v1176
      %v1240 = vmul.f32 %v1169, %v1176
      %v1241 = vmul.f32 %v1170, %v1176
      %v1242 = vld [vmem:[%s3] sm:$0x1]
      %v1244 = vlaneseq
      %v1245 = vshrl.u32 %v1244, 7
      %v1246 = vsub.s32 0, %v1245
      %v1247 = vrot.slane %v1242, %v1246
      %v1249 = vadd.f32 %v1178, %v1247
      %v1250 = vadd.f32 %v1179, %v1247
      %v1251 = vadd.f32 %v1180, %v1247
      %v1252 = vadd.f32 %v1181, %v1247
      %v1253 = vadd.f32 %v1182, %v1247
      %v1254 = vadd.f32 %v1183, %v1247
      %v1255 = vadd.f32 %v1184, %v1247
      %v1256 = vadd.f32 %v1185, %v1247
      %v1257 = vadd.f32 %v1186, %v1247
      %v1258 = vadd.f32 %v1187, %v1247
      %v1259 = vadd.f32 %v1188, %v1247
      %v1260 = vadd.f32 %v1189, %v1247
      %v1261 = vadd.f32 %v1190, %v1247
      %v1262 = vadd.f32 %v1191, %v1247
      %v1263 = vadd.f32 %v1192, %v1247
      %v1264 = vadd.f32 %v1193, %v1247
      %v1265 = vadd.f32 %v1194, %v1247
      %v1266 = vadd.f32 %v1195, %v1247
      %v1267 = vadd.f32 %v1196, %v1247
      %v1268 = vadd.f32 %v1197, %v1247
      %v1269 = vadd.f32 %v1198, %v1247
      %v1270 = vadd.f32 %v1199, %v1247
      %v1271 = vadd.f32 %v1200, %v1247
      %v1272 = vadd.f32 %v1201, %v1247
      %v1273 = vadd.f32 %v1202, %v1247
      %v1274 = vadd.f32 %v1203, %v1247
      %v1275 = vadd.f32 %v1204, %v1247
      %v1276 = vadd.f32 %v1205, %v1247
      %v1277 = vadd.f32 %v1206, %v1247
      %v1278 = vadd.f32 %v1207, %v1247
      %v1279 = vadd.f32 %v1208, %v1247
      %v1280 = vadd.f32 %v1209, %v1247
      %v1281 = vadd.f32 %v1210, %v1247
      %v1282 = vadd.f32 %v1211, %v1247
      %v1283 = vadd.f32 %v1212, %v1247
      %v1284 = vadd.f32 %v1213, %v1247
      %v1285 = vadd.f32 %v1214, %v1247
      %v1286 = vadd.f32 %v1215, %v1247
      %v1287 = vadd.f32 %v1216, %v1247
      %v1288 = vadd.f32 %v1217, %v1247
      %v1289 = vadd.f32 %v1218, %v1247
      %v1290 = vadd.f32 %v1219, %v1247
      %v1291 = vadd.f32 %v1220, %v1247
      %v1292 = vadd.f32 %v1221, %v1247
      %v1293 = vadd.f32 %v1222, %v1247
      %v1294 = vadd.f32 %v1223, %v1247
      %v1295 = vadd.f32 %v1224, %v1247
      %v1296 = vadd.f32 %v1225, %v1247
      %v1297 = vadd.f32 %v1226, %v1247
      %v1298 = vadd.f32 %v1227, %v1247
      %v1299 = vadd.f32 %v1228, %v1247
      %v1300 = vadd.f32 %v1229, %v1247
      %v1301 = vadd.f32 %v1230, %v1247
      %v1302 = vadd.f32 %v1231, %v1247
      %v1303 = vadd.f32 %v1232, %v1247
      %v1304 = vadd.f32 %v1233, %v1247
      %v1305 = vadd.f32 %v1234, %v1247
      %v1306 = vadd.f32 %v1235, %v1247
      %v1307 = vadd.f32 %v1236, %v1247
      %v1308 = vadd.f32 %v1237, %v1247
      %v1309 = vadd.f32 %v1238, %v1247
      %v1310 = vadd.f32 %v1239, %v1247
      %v1311 = vadd.f32 %v1240, %v1247
      %v1312 = vadd.f32 %v1241, %v1247
      %v1313 = vmax.f32 %v1249, 0.0
      %v1314 = vmax.f32 %v1250, 0.0
      %v1315 = vmax.f32 %v1251, 0.0
      %v1316 = vmax.f32 %v1252, 0.0
      %v1317 = vmax.f32 %v1253, 0.0
      %v1318 = vmax.f32 %v1254, 0.0
      %v1319 = vmax.f32 %v1255, 0.0
      %v1320 = vmax.f32 %v1256, 0.0
      %v1321 = vmax.f32 %v1257, 0.0
      %v1322 = vmax.f32 %v1258, 0.0
      %v1323 = vmax.f32 %v1259, 0.0
      %v1324 = vmax.f32 %v1260, 0.0
      %v1325 = vmax.f32 %v1261, 0.0
      %v1326 = vmax.f32 %v1262, 0.0
      %v1327 = vmax.f32 %v1263, 0.0
      %v1328 = vmax.f32 %v1264, 0.0
      %v1329 = vmax.f32 %v1265, 0.0
      %v1330 = vmax.f32 %v1266, 0.0
      %v1331 = vmax.f32 %v1267, 0.0
      %v1332 = vmax.f32 %v1268, 0.0
      %v1333 = vmax.f32 %v1269, 0.0
      %v1334 = vmax.f32 %v1270, 0.0
      %v1335 = vmax.f32 %v1271, 0.0
      %v1336 = vmax.f32 %v1272, 0.0
      %v1337 = vmax.f32 %v1273, 0.0
      %v1338 = vmax.f32 %v1274, 0.0
      %v1339 = vmax.f32 %v1275, 0.0
      %v1340 = vmax.f32 %v1276, 0.0
      %v1341 = vmax.f32 %v1277, 0.0
      %v1342 = vmax.f32 %v1278, 0.0
      %v1343 = vmax.f32 %v1279, 0.0
      %v1344 = vmax.f32 %v1280, 0.0
      %v1345 = vmax.f32 %v1281, 0.0
      %v1346 = vmax.f32 %v1282, 0.0
      %v1347 = vmax.f32 %v1283, 0.0
      %v1348 = vmax.f32 %v1284, 0.0
      %v1349 = vmax.f32 %v1285, 0.0
      %v1350 = vmax.f32 %v1286, 0.0
      %v1351 = vmax.f32 %v1287, 0.0
      %v1352 = vmax.f32 %v1288, 0.0
      %v1353 = vmax.f32 %v1289, 0.0
      %v1354 = vmax.f32 %v1290, 0.0
      %v1355 = vmax.f32 %v1291, 0.0
      %v1356 = vmax.f32 %v1292, 0.0
      %v1357 = vmax.f32 %v1293, 0.0
      %v1358 = vmax.f32 %v1294, 0.0
      %v1359 = vmax.f32 %v1295, 0.0
      %v1360 = vmax.f32 %v1296, 0.0
      %v1361 = vmax.f32 %v1297, 0.0
      %v1362 = vmax.f32 %v1298, 0.0
      %v1363 = vmax.f32 %v1299, 0.0
      %v1364 = vmax.f32 %v1300, 0.0
      %v1365 = vmax.f32 %v1301, 0.0
      %v1366 = vmax.f32 %v1302, 0.0
      %v1367 = vmax.f32 %v1303, 0.0
      %v1368 = vmax.f32 %v1304, 0.0
      %v1369 = vmax.f32 %v1305, 0.0
      %v1370 = vmax.f32 %v1306, 0.0
      %v1371 = vmax.f32 %v1307, 0.0
      %v1372 = vmax.f32 %v1308, 0.0
      %v1373 = vmax.f32 %v1309, 0.0
      %v1374 = vmax.f32 %v1310, 0.0
      %v1375 = vmax.f32 %v1311, 0.0
      %v1376 = vmax.f32 %v1312, 0.0
      %v1377 = vpack.c.bf16 %v1314, %v1313
      %v1378 = vpack.c.bf16 %v1316, %v1315
      %v1379 = vpack.c.bf16 %v1318, %v1317
      %v1380 = vpack.c.bf16 %v1320, %v1319
      %v1381 = vpack.c.bf16 %v1322, %v1321
      %v1382 = vpack.c.bf16 %v1324, %v1323
      %v1383 = vpack.c.bf16 %v1326, %v1325
      %v1384 = vpack.c.bf16 %v1328, %v1327
      %v1385 = vpack.c.bf16 %v1330, %v1329
      %v1386 = vpack.c.bf16 %v1332, %v1331
      %v1387 = vpack.c.bf16 %v1334, %v1333
      %v1388 = vpack.c.bf16 %v1336, %v1335
      %v1389 = vpack.c.bf16 %v1338, %v1337
      %v1390 = vpack.c.bf16 %v1340, %v1339
      %v1391 = vpack.c.bf16 %v1342, %v1341
      %v1392 = vpack.c.bf16 %v1344, %v1343
      %v1393 = vpack.c.bf16 %v1346, %v1345
      %v1394 = vpack.c.bf16 %v1348, %v1347
      %v1395 = vpack.c.bf16 %v1350, %v1349
      %v1396 = vpack.c.bf16 %v1352, %v1351
      %v1397 = vpack.c.bf16 %v1354, %v1353
      %v1398 = vpack.c.bf16 %v1356, %v1355
      %v1399 = vpack.c.bf16 %v1358, %v1357
      %v1400 = vpack.c.bf16 %v1360, %v1359
      %v1401 = vpack.c.bf16 %v1362, %v1361
      %v1402 = vpack.c.bf16 %v1364, %v1363
      %v1403 = vpack.c.bf16 %v1366, %v1365
      %v1404 = vpack.c.bf16 %v1368, %v1367
      %v1405 = vpack.c.bf16 %v1370, %v1369
      %v1406 = vpack.c.bf16 %v1372, %v1371
      %v1407 = vpack.c.bf16 %v1374, %v1373
      %v1408 = vpack.c.bf16 %v1376, %v1375
      %v1441 = vunpack.c.l.b16 %v1377
      %v1442 = vunpack.c.h.b16 %v1377
      %v1443 = vunpack.c.l.b16 %v1378
      %v1444 = vunpack.c.h.b16 %v1378
      %v1445 = vunpack.c.l.b16 %v1379
      %v1446 = vunpack.c.h.b16 %v1379
      %v1447 = vunpack.c.l.b16 %v1380
      %v1448 = vunpack.c.h.b16 %v1380
      %v1449 = vunpack.c.l.b16 %v1381
      %v1450 = vunpack.c.h.b16 %v1381
      %v1451 = vunpack.c.l.b16 %v1382
      %v1452 = vunpack.c.h.b16 %v1382
      %v1453 = vunpack.c.l.b16 %v1383
      %v1454 = vunpack.c.h.b16 %v1383
      %v1455 = vunpack.c.l.b16 %v1384
      %v1456 = vunpack.c.h.b16 %v1384
      %v1457 = vunpack.c.l.b16 %v1385
      %v1458 = vunpack.c.h.b16 %v1385
      %v1459 = vunpack.c.l.b16 %v1386
      %v1460 = vunpack.c.h.b16 %v1386
      %v1461 = vunpack.c.l.b16 %v1387
      %v1462 = vunpack.c.h.b16 %v1387
      %v1463 = vunpack.c.l.b16 %v1388
      %v1464 = vunpack.c.h.b16 %v1388
      %v1465 = vunpack.c.l.b16 %v1389
      %v1466 = vunpack.c.h.b16 %v1389
      %v1467 = vunpack.c.l.b16 %v1390
      %v1468 = vunpack.c.h.b16 %v1390
      %v1469 = vunpack.c.l.b16 %v1391
      %v1470 = vunpack.c.h.b16 %v1391
      %v1471 = vunpack.c.l.b16 %v1392
      %v1472 = vunpack.c.h.b16 %v1392
      %v1473 = vunpack.c.l.b16 %v1393
      %v1474 = vunpack.c.h.b16 %v1393
      %v1475 = vunpack.c.l.b16 %v1394
      %v1476 = vunpack.c.h.b16 %v1394
      %v1477 = vunpack.c.l.b16 %v1395
      %v1478 = vunpack.c.h.b16 %v1395
      %v1479 = vunpack.c.l.b16 %v1396
      %v1480 = vunpack.c.h.b16 %v1396
      %v1481 = vunpack.c.l.b16 %v1397
      %v1482 = vunpack.c.h.b16 %v1397
      %v1483 = vunpack.c.l.b16 %v1398
      %v1484 = vunpack.c.h.b16 %v1398
      %v1485 = vunpack.c.l.b16 %v1399
      %v1486 = vunpack.c.h.b16 %v1399
      %v1487 = vunpack.c.l.b16 %v1400
      %v1488 = vunpack.c.h.b16 %v1400
      %v1489 = vunpack.c.l.b16 %v1401
      %v1490 = vunpack.c.h.b16 %v1401
      %v1491 = vunpack.c.l.b16 %v1402
      %v1492 = vunpack.c.h.b16 %v1402
      %v1493 = vunpack.c.l.b16 %v1403
      %v1494 = vunpack.c.h.b16 %v1403
      %v1495 = vunpack.c.l.b16 %v1404
      %v1496 = vunpack.c.h.b16 %v1404
      %v1497 = vunpack.c.l.b16 %v1405
      %v1498 = vunpack.c.h.b16 %v1405
      %v1499 = vunpack.c.l.b16 %v1406
      %v1500 = vunpack.c.h.b16 %v1406
      %v1501 = vunpack.c.l.b16 %v1407
      %v1502 = vunpack.c.h.b16 %v1407
      %v1503 = vunpack.c.l.b16 %v1408
      %v1504 = vunpack.c.h.b16 %v1408
      %v1505 = vpack.c.b16 %v1441, %v1441
      %v1506 = vpack.c.b16 %v1442, %v1442
      %v1507 = vpack.c.b16 %v1443, %v1443
      %v1508 = vpack.c.b16 %v1444, %v1444
      %v1509 = vpack.c.b16 %v1445, %v1445
      %v1510 = vpack.c.b16 %v1446, %v1446
      %v1511 = vpack.c.b16 %v1447, %v1447
      %v1512 = vpack.c.b16 %v1448, %v1448
      %v1513 = vpack.c.b16 %v1449, %v1449
      %v1514 = vpack.c.b16 %v1450, %v1450
      %v1515 = vpack.c.b16 %v1451, %v1451
      %v1516 = vpack.c.b16 %v1452, %v1452
      %v1517 = vpack.c.b16 %v1453, %v1453
      %v1518 = vpack.c.b16 %v1454, %v1454
      %v1519 = vpack.c.b16 %v1455, %v1455
      %v1520 = vpack.c.b16 %v1456, %v1456
      %v1521 = vpack.c.b16 %v1457, %v1457
      %v1522 = vpack.c.b16 %v1458, %v1458
      %v1523 = vpack.c.b16 %v1459, %v1459
      %v1524 = vpack.c.b16 %v1460, %v1460
      %v1525 = vpack.c.b16 %v1461, %v1461
      %v1526 = vpack.c.b16 %v1462, %v1462
      %v1527 = vpack.c.b16 %v1463, %v1463
      %v1528 = vpack.c.b16 %v1464, %v1464
      %v1529 = vpack.c.b16 %v1465, %v1465
      %v1530 = vpack.c.b16 %v1466, %v1466
      %v1531 = vpack.c.b16 %v1467, %v1467
      %v1532 = vpack.c.b16 %v1468, %v1468
      %v1533 = vpack.c.b16 %v1469, %v1469
      %v1534 = vpack.c.b16 %v1470, %v1470
      %v1535 = vpack.c.b16 %v1471, %v1471
      %v1536 = vpack.c.b16 %v1472, %v1472
      %v1537 = vpack.c.b16 %v1473, %v1473
      %v1538 = vpack.c.b16 %v1474, %v1474
      %v1539 = vpack.c.b16 %v1475, %v1475
      %v1540 = vpack.c.b16 %v1476, %v1476
      %v1541 = vpack.c.b16 %v1477, %v1477
      %v1542 = vpack.c.b16 %v1478, %v1478
      %v1543 = vpack.c.b16 %v1479, %v1479
      %v1544 = vpack.c.b16 %v1480, %v1480
      %v1545 = vpack.c.b16 %v1481, %v1481
      %v1546 = vpack.c.b16 %v1482, %v1482
      %v1547 = vpack.c.b16 %v1483, %v1483
      %v1548 = vpack.c.b16 %v1484, %v1484
      %v1549 = vpack.c.b16 %v1485, %v1485
      %v1550 = vpack.c.b16 %v1486, %v1486
      %v1551 = vpack.c.b16 %v1487, %v1487
      %v1552 = vpack.c.b16 %v1488, %v1488
      %v1553 = vpack.c.b16 %v1489, %v1489
      %v1554 = vpack.c.b16 %v1490, %v1490
      %v1555 = vpack.c.b16 %v1491, %v1491
      %v1556 = vpack.c.b16 %v1492, %v1492
      %v1557 = vpack.c.b16 %v1493, %v1493
      %v1558 = vpack.c.b16 %v1494, %v1494
      %v1559 = vpack.c.b16 %v1495, %v1495
      %v1560 = vpack.c.b16 %v1496, %v1496
      %v1561 = vpack.c.b16 %v1497, %v1497
      %v1562 = vpack.c.b16 %v1498, %v1498
      %v1563 = vpack.c.b16 %v1499, %v1499
      %v1564 = vpack.c.b16 %v1500, %v1500
      %v1565 = vpack.c.b16 %v1501, %v1501
      %v1566 = vpack.c.b16 %v1502, %v1502
      %v1567 = vpack.c.b16 %v1503, %v1503
      %v1568 = vpack.c.b16 %v1504, %v1504
      %1633 = vst [vmem:[#allocation3] sm:$0xf] %v1505
      %1634 = vst [vmem:[#allocation3 + $0x4] sm:$0xf] %v1506
      %1635 = vst [vmem:[#allocation3 + $0x8] sm:$0xf] %v1507
      %1636 = vst [vmem:[#allocation3 + $0xc] sm:$0xf] %v1508
      %1637 = vst [vmem:[#allocation3 + $0x10] sm:$0xf] %v1509
      %1638 = vst [vmem:[#allocation3 + $0x14] sm:$0xf] %v1510
      %1639 = vst [vmem:[#allocation3 + $0x18] sm:$0xf] %v1511
      %1640 = vst [vmem:[#allocation3 + $0x1c] sm:$0xf] %v1512
      %1641 = vst [vmem:[#allocation3 + $0x20] sm:$0xf] %v1513
      %1642 = vst [vmem:[#allocation3 + $0x24] sm:$0xf] %v1514
      %1643 = vst [vmem:[#allocation3 + $0x28] sm:$0xf] %v1515
      %1644 = vst [vmem:[#allocation3 + $0x2c] sm:$0xf] %v1516
      %1645 = vst [vmem:[#allocation3 + $0x30] sm:$0xf] %v1517
      %1646 = vst [vmem:[#allocation3 + $0x34] sm:$0xf] %v1518
      %1647 = vst [vmem:[#allocation3 + $0x38] sm:$0xf] %v1519
      %1648 = vst [vmem:[#allocation3 + $0x3c] sm:$0xf] %v1520
      %1649 = vst [vmem:[#allocation3 + $0x40] sm:$0xf] %v1521
      %1650 = vst [vmem:[#allocation3 + $0x44] sm:$0xf] %v1522
      %1651 = vst [vmem:[#allocation3 + $0x48] sm:$0xf] %v1523
      %1652 = vst [vmem:[#allocation3 + $0x4c] sm:$0xf] %v1524
      %1653 = vst [vmem:[#allocation3 + $0x50] sm:$0xf] %v1525
      %1654 = vst [vmem:[#allocation3 + $0x54] sm:$0xf] %v1526
      %1655 = vst [vmem:[#allocation3 + $0x58] sm:$0xf] %v1527
      %1656 = vst [vmem:[#allocation3 + $0x5c] sm:$0xf] %v1528
      %1657 = vst [vmem:[#allocation3 + $0x60] sm:$0xf] %v1529
      %1658 = vst [vmem:[#allocation3 + $0x64] sm:$0xf] %v1530
      %1659 = vst [vmem:[#allocation3 + $0x68] sm:$0xf] %v1531
      %1660 = vst [vmem:[#allocation3 + $0x6c] sm:$0xf] %v1532
      %1661 = vst [vmem:[#allocation3 + $0x70] sm:$0xf] %v1533
      %1662 = vst [vmem:[#allocation3 + $0x74] sm:$0xf] %v1534
      %1663 = vst [vmem:[#allocation3 + $0x78] sm:$0xf] %v1535
      %1664 = vst [vmem:[#allocation3 + $0x7c] sm:$0xf] %v1536
      %1665 = vst [vmem:[#allocation3 + $0x80] sm:$0xf] %v1537
      %1666 = vst [vmem:[#allocation3 + $0x84] sm:$0xf] %v1538
      %1667 = vst [vmem:[#allocation3 + $0x88] sm:$0xf] %v1539
      %1668 = vst [vmem:[#allocation3 + $0x8c] sm:$0xf] %v1540
      %1669 = vst [vmem:[#allocation3 + $0x90] sm:$0xf] %v1541
      %1670 = vst [vmem:[#allocation3 + $0x94] sm:$0xf] %v1542
      %1671 = vst [vmem:[#allocation3 + $0x98] sm:$0xf] %v1543
      %1672 = vst [vmem:[#allocation3 + $0x9c] sm:$0xf] %v1544
      %1673 = vst [vmem:[#allocation3 + $0xa0] sm:$0xf] %v1545
      %1674 = vst [vmem:[#allocation3 + $0xa4] sm:$0xf] %v1546
      %1675 = vst [vmem:[#allocation3 + $0xa8] sm:$0xf] %v1547
      %1676 = vst [vmem:[#allocation3 + $0xac] sm:$0xf] %v1548
      %1677 = vst [vmem:[#allocation3 + $0xb0] sm:$0xf] %v1549
      %1678 = vst [vmem:[#allocation3 + $0xb4] sm:$0xf] %v1550
      %1679 = vst [vmem:[#allocation3 + $0xb8] sm:$0xf] %v1551
      %1680 = vst [vmem:[#allocation3 + $0xbc] sm:$0xf] %v1552
      %1681 = vst [vmem:[#allocation3 + $0xc0] sm:$0xf] %v1553
      %1682 = vst [vmem:[#allocation3 + $0xc4] sm:$0xf] %v1554
      %1683 = vst [vmem:[#allocation3 + $0xc8] sm:$0xf] %v1555
      %1684 = vst [vmem:[#allocation3 + $0xcc] sm:$0xf] %v1556
      %1685 = vst [vmem:[#allocation3 + $0xd0] sm:$0xf] %v1557
      %1686 = vst [vmem:[#allocation3 + $0xd4] sm:$0xf] %v1558
      %1687 = vst [vmem:[#allocation3 + $0xd8] sm:$0xf] %v1559
      %1688 = vst [vmem:[#allocation3 + $0xdc] sm:$0xf] %v1560
      %1689 = vst [vmem:[#allocation3 + $0xe0] sm:$0xf] %v1561
      %1690 = vst [vmem:[#allocation3 + $0xe4] sm:$0xf] %v1562
      %1691 = vst [vmem:[#allocation3 + $0xe8] sm:$0xf] %v1563
      %1692 = vst [vmem:[#allocation3 + $0xec] sm:$0xf] %v1564
      %1693 = vst [vmem:[#allocation3 + $0xf0] sm:$0xf] %v1565
      %1694 = vst [vmem:[#allocation3 + $0xf4] sm:$0xf] %v1566
      %1695 = vst [vmem:[#allocation3 + $0xf8] sm:$0xf] %v1567
      %1696 = vst [vmem:[#allocation3 + $0xfc] sm:$0xf] %v1568
    $region29: #{fused_matmul.1} parent=1 // pred_fallthru
      _
    // Predicated region
    $region30: #{fused_matmul.1} parent=1 // pred_check
      _
    $region31: #{fused_matmul.1} parent=1 // pred_check_branch
      %1698 = sbr.rel (0) target = $region33
    $region32: #{fused_matmul.1} parent=1 // pred_region
      %s1700 = ssub.s32 4096, 4096
      %1701 = vsyncadd [#allocation4], %s1700
      %s1702 = sshll.u32 [#allocation3], 4
      %s1703 = int_to_ptr.vmem [resolvable:$true] %s1702
      %1708 = dma.vmem_to_hbm [thread:$0]  %s1703, 4096, %s4, [#allocation4], 64, 64, 4
    $region33: #{fused_matmul.1} parent=1 // pred_fallthru
      _
    // Predicated region
    $region34: #{fused_matmul.1} parent=1 // pred_check
      _
    $region35: #{fused_matmul.1} parent=1 // pred_check_branch
      %1710 = sbr.rel (0) target = $region37
    $region36: #{fused_matmul.1} parent=1 // pred_region
      %1711 = dma.done [#allocation4], 4096
    $region37: #{fused_matmul.1} parent=1 // pred_fallthru
      _
    %1712 = vsyncpa [#allocation4], 1

</llo_original>
